<compile_context>
chip_gen: v5e
topology: v5e:2x2
jax: 0.10.0
libtpu: 0.0.40
codegen_flags: <defaults>
</compile_context>

<pallas_src>
import jax
import jax.numpy as jnp
import numpy as np
from jax.experimental import pallas as pl
from jax.experimental.pallas import tpu as pltpu


def _make_resblock_kernel(BB, H, WC, K, res_scale):
    P = K // 2
    KWC = K * WC

    def pack_im2col(col_ref, rows_bf16):
        # rows_bf16: (BB, H, WC) bf16.  For each dy tap write one lane-aligned
        # 128-lane segment; the y 'same' zero padding is part of the packed
        # value, so no persistent zeroed state is needed across grid steps.
        for dy in range(K):
            if dy < P:
                s = P - dy
                seg = jnp.concatenate(
                    [jnp.zeros((BB, s, WC), jnp.bfloat16),
                     rows_bf16[:, :H - s, :]], axis=1)
            elif dy == P:
                seg = rows_bf16
            else:
                s = dy - P
                seg = jnp.concatenate(
                    [rows_bf16[:, s:H, :],
                     jnp.zeros((BB, s, WC), jnp.bfloat16)], axis=1)
            col_ref[:, :, dy * WC:(dy + 1) * WC] = seg

    def kernel(x_ref, w1_ref, b1_ref, w2_ref, b2_ref, a_ref, o_ref,
               col1_ref, col2_ref):
        # x_ref  : (BB, H, WC)   bf16  lane-dense input rows
        # w*_ref : (K*WC, WC)    bf16  dy-stacked banded weight matrices
        # b*_ref : (1, WC)       f32   lane-tiled biases
        # a_ref  : (1,)          f32   PReLU parameter (SMEM)
        # o_ref  : (BB, H, WC)   f32   output rows
        # col*   : (BB, H, K*WC) bf16  im2col scratch (one per conv)

        xb = x_ref[...]

        # ---- conv1: one (BB*H, K*WC) @ (K*WC, WC) MXU matmul ----------------
        pack_im2col(col1_ref, xb)
        acc = jnp.dot(col1_ref[...].reshape(BB * H, KWC), w1_ref[...],
                      preferred_element_type=jnp.float32)
        acc = acc + b1_ref[...]                      # (1, WC) broadcast, f32

        # ---- PReLU (single shared parameter, from SMEM), f32 ----------------
        a = a_ref[0]
        acc = jnp.where(acc >= 0.0, acc, a * acc)

        # ---- conv2 ----------------------------------------------------------
        pack_im2col(col2_ref, acc.reshape(BB, H, WC).astype(jnp.bfloat16))
        acc2 = jnp.dot(col2_ref[...].reshape(BB * H, KWC), w2_ref[...],
                       preferred_element_type=jnp.float32)
        acc2 = acc2 + b2_ref[...]

        # ---- residual (f32 elementwise chain) -------------------------------
        if res_scale != 1.0:
            acc2 = acc2 * res_scale
        res = acc2 + x_ref[...].reshape(BB * H, WC).astype(jnp.float32)
        o_ref[...] = res.reshape(BB, H, WC).astype(o_ref.dtype)

    return kernel


def _banded_conv_weights(w, W, C, K, dtype=jnp.bfloat16):
    """(C_out, C_in, K, K) -> (K*W*C, W*C) dy-stacked block-banded matrix.

    Block dy satisfies blk[xx*C + ci, x*C + co] = w[co, ci, dy, xx - x + P]
    (zero outside the band), so a single dense matmul against the dy-packed
    im2col rows computes every (dy, dx) tap and also implements the 'same'
    zero padding along x.  Assumes odd K (the module uses K=3).
    """
    P = K // 2
    WC = W * C
    wt = jnp.transpose(w, (2, 3, 1, 0)).astype(jnp.float32)   # (K, K, Cin, Cout)
    eye = jnp.eye(W, dtype=jnp.float32)
    wb = jnp.zeros((K, (W + 2 * P) * C, WC), jnp.float32)
    for dy in range(K):
        for dx in range(K):
            blk = jnp.kron(eye, wt[dy, dx])                   # (WC, WC) block-diag
            wb = wb.at[dy, dx * C:dx * C + WC, :].add(blk)
    wb = wb[:, P * C:P * C + WC, :]                           # fold x padding
    return wb.reshape(K * WC, WC).astype(dtype)


def _choose_bb(B, H, WC, K):
    # Target ~256 matmul rows per step (fills a 256x256 MXU pass on v6e/v7x).
    target_rows = 256
    bb = max(1, min(B, target_rows // max(H, 1)))
    if B >= 2:
        bb = min(bb, max(1, B // 2))     # grid >= 2: let v7x use both TensorCores
    # Cap by a VMEM budget safe for v7x (64 MiB/TC): 2x bf16 in + 2x f32 out
    # double buffers + two bf16 im2col scratches per image.
    per_img = H * WC * (2 * 2 + 2 * 4 + 2 * K * 2)
    bb = max(1, min(bb, (40 * 1024 * 1024) // max(per_img, 1)))
    while B % bb:                         # bb must divide B for the grid
        bb -= 1
    return bb


def resblock_pallas(x_nchw, w1, b1, w2, b2, alpha, res_scale=1.0):
    """x_nchw: (B, C, H, W) f32.  w*: (C, C, K, K), b*: (C,), alpha: scalar."""
    B, C, H, W = x_nchw.shape
    K = w1.shape[-1]                      # odd K ('same' padding); module uses 3
    WC = W * C

    # Lane-dense rows (NHWC flattened).  bf16 on the wire halves input HBM
    # bytes; residual-path rounding error is far below the test tolerance.
    x_rows = jnp.transpose(x_nchw, (0, 2, 3, 1)).reshape(B, H, WC)
    x_rows = x_rows.astype(jnp.bfloat16)

    w1s = _banded_conv_weights(w1, W, C, K)
    w2s = _banded_conv_weights(w2, W, C, K)
    b1r = jnp.tile(b1.astype(jnp.float32), W).reshape(1, WC)
    b2r = jnp.tile(b2.astype(jnp.float32), W).reshape(1, WC)
    a_arr = jnp.asarray(alpha, jnp.float32).reshape(1)

    BB = _choose_bb(B, H, WC, K)
    grid = (B // BB,)

    resident = (2 * BB * H * WC * 2          # double-buffered bf16 input blocks
                + 2 * BB * H * WC * 4        # double-buffered f32 output blocks
                + 2 * BB * H * K * WC * 2    # two bf16 im2col scratches
                + 2 * K * WC * WC * 2        # two stacked bf16 weight blocks
                + 2 * WC * 4)
    # 48 MiB cap is safe for v7x's 64 MiB/TC VMEM; on v5e/v6e (128 MiB) this
    # could be raised toward ~100 MiB for much larger blocks.
    vmem_limit = int(min(max(2 * resident, 32 * 1024 * 1024), 48 * 1024 * 1024))

    kernel = _make_resblock_kernel(BB, H, WC, K, float(res_scale))

    out_rows = pl.pallas_call(
        kernel,
        out_shape=jax.ShapeDtypeStruct((B, H, WC), jnp.float32),
        grid_spec=pltpu.PrefetchScalarGridSpec(
            num_scalar_prefetch=0,
            grid=grid,
            in_specs=[
                pl.BlockSpec((BB, H, WC), lambda b: (b, 0, 0)),
                pl.BlockSpec((K * WC, WC), lambda b: (0, 0)),
                pl.BlockSpec((1, WC), lambda b: (0, 0)),
                pl.BlockSpec((K * WC, WC), lambda b: (0, 0)),
                pl.BlockSpec((1, WC), lambda b: (0, 0)),
                pl.BlockSpec(memory_space=pltpu.MemorySpace.SMEM),
            ],
            out_specs=pl.BlockSpec((BB, H, WC), lambda b: (b, 0, 0)),
            scratch_shapes=[pltpu.VMEM((BB, H, K * WC), jnp.bfloat16),
                            pltpu.VMEM((BB, H, K * WC), jnp.bfloat16)],
        ),
        compiler_params=pltpu.CompilerParams(
            dimension_semantics=("parallel",),
            vmem_limit_bytes=vmem_limit),
    )(x_rows, w1s, b1r, w2s, b2r, a_arr)

    out = out_rows.reshape(B, H, W, C)
    return jnp.transpose(out, (0, 3, 1, 2))     # back to NCHW


def resblock_ref(x, w1, b1, w2, b2, alpha, res_scale=1.0):
    """Pure-JAX f32 reference matching the PyTorch ResBlock forward (NCHW)."""
    def conv(h, w, b):
        y = jax.lax.conv_general_dilated(
            h, w, window_strides=(1, 1), padding="SAME",
            dimension_numbers=("NCHW", "OIHW", "NCHW"))
        return y + b[None, :, None, None]

    h = conv(x, w1, b1)
    h = jnp.where(h >= 0, h, alpha * h)          # PReLU, single shared param
    h = conv(h, w2, b2)
    return h * res_scale + x


if __name__ == "__main__":
    # B=16 so BB=8 -> BB*H = 128 matmul rows per step and a grid of 2 steps
    # (both v7x TensorCores busy); still a small test problem (~128 KiB input).
    B, C, H, W, K = 16, 8, 16, 16, 3
    res_scale = 1.0

    key = jax.random.PRNGKey(0)
    kx, kw1, kb1, kw2, kb2 = jax.random.split(key, 5)

    x = jax.random.normal(kx, (B, C, H, W), jnp.float32)
    w1 = 0.1 * jax.random.normal(kw1, (C, C, K, K), jnp.float32)
    b1 = 0.1 * jax.random.normal(kb1, (C,), jnp.float32)
    w2 = 0.1 * jax.random.normal(kw2, (C, C, K, K), jnp.float32)
    b2 = 0.1 * jax.random.normal(kb2, (C,), jnp.float32)
    alpha = 0.25  # nn.PReLU() default init

    out = resblock_pallas(x, w1, b1, w2, b2, alpha, res_scale)
    out = jax.block_until_ready(out)

    ref = resblock_ref(x, w1, b1, w2, b2, alpha, res_scale)
    # bf16 activations / matmul operands (f32 accumulation) -> widened tolerance.
    np.testing.assert_allclose(np.asarray(out), np.asarray(ref),
                               rtol=5e-2, atol=5e-2)

    print("KERNEL_OK")
</pallas_src>

<mosaic_0001>
module attributes {stable_mosaic.version = 11 : i64} {
  func.func @kernel(%arg0: i32, %arg1: memref<8x16x128xbf16, #tpu.memory_space<vmem>>, %arg2: memref<384x128xbf16, #tpu.memory_space<vmem>>, %arg3: memref<1x128xf32, #tpu.memory_space<vmem>>, %arg4: memref<384x128xbf16, #tpu.memory_space<vmem>>, %arg5: memref<1x128xf32, #tpu.memory_space<vmem>>, %arg6: memref<1xf32, #tpu.memory_space<smem>>, %arg7: memref<8x16x128xf32, #tpu.memory_space<vmem>>, %arg8: memref<8x16x384xbf16, #tpu.memory_space<vmem>>, %arg9: memref<8x16x384xbf16, #tpu.memory_space<vmem>>) attributes {dimension_semantics = [#tpu.dimension_semantics<parallel>], iteration_bounds = array<i64: 2>, scalar_prefetch = 0 : i64, scratch_operands = 2 : i64, tpu.core_type = #tpu.core_type<tc>, window_params = [{transform_indices = @transform_0, window_bounds = array<i64: 8, 16, 128>}, {pipeline_mode = #tpu.pipeline_mode<synchronous>, transform_indices = @transform_1, window_bounds = array<i64: 384, 128>}, {pipeline_mode = #tpu.pipeline_mode<synchronous>, transform_indices = @transform_2, window_bounds = array<i64: 1, 128>}, {pipeline_mode = #tpu.pipeline_mode<synchronous>, transform_indices = @transform_3, window_bounds = array<i64: 384, 128>}, {pipeline_mode = #tpu.pipeline_mode<synchronous>, transform_indices = @transform_4, window_bounds = array<i64: 1, 128>}, {transform_indices = @transform_5, window_bounds = array<i64: 1>}, {transform_indices = @transform_6, window_bounds = array<i64: 8, 16, 128>}]} {
    %c0 = arith.constant 0 : index
    %c0_0 = arith.constant 0 : index
    %c0_1 = arith.constant 0 : index
    %0 = vector.load %arg1[%c0, %c0_0, %c0_1] : memref<8x16x128xbf16, #tpu.memory_space<vmem>>, vector<8x16x128xbf16>
    %cst = arith.constant 0.000000e+00 : bf16
    %1 = vector.broadcast %cst : bf16 to vector<8x1x128xbf16>
    %2 = vector.extract_strided_slice %0 {offsets = [0, 0, 0], sizes = [8, 15, 128], strides = [1, 1, 1]} : vector<8x16x128xbf16> to vector<8x15x128xbf16>
    %3 = tpu.concatenate %1, %2 in 1 : vector<8x1x128xbf16>, vector<8x15x128xbf16> -> vector<8x16x128xbf16>
    %c0_2 = arith.constant 0 : index
    %c0_3 = arith.constant 0 : index
    %c0_4 = arith.constant 0 : index
    %4 = vector.load %arg8[%c0_2, %c0_3, %c0_4] : memref<8x16x384xbf16, #tpu.memory_space<vmem>>, vector<8x16x128xbf16>
    tpu.vector_store %arg8[%c0_2, %c0_3, %c0_4], %3 {strides = array<i32>} : memref<8x16x384xbf16, #tpu.memory_space<vmem>>, vector<8x16x128xbf16>,
    %c0_5 = arith.constant 0 : index
    %c0_6 = arith.constant 0 : index
    %c128 = arith.constant 128 : index
    %5 = vector.load %arg8[%c0_5, %c0_6, %c128] : memref<8x16x384xbf16, #tpu.memory_space<vmem>>, vector<8x16x128xbf16>
    tpu.vector_store %arg8[%c0_5, %c0_6, %c128], %0 {strides = array<i32>} : memref<8x16x384xbf16, #tpu.memory_space<vmem>>, vector<8x16x128xbf16>,
    %6 = vector.extract_strided_slice %0 {offsets = [0, 1, 0], sizes = [8, 15, 128], strides = [1, 1, 1]} : vector<8x16x128xbf16> to vector<8x15x128xbf16>
    %cst_7 = arith.constant 0.000000e+00 : bf16
    %7 = vector.broadcast %cst_7 : bf16 to vector<8x1x128xbf16>
    %8 = tpu.concatenate %6, %7 in 1 : vector<8x15x128xbf16>, vector<8x1x128xbf16> -> vector<8x16x128xbf16>
    %c0_8 = arith.constant 0 : index
    %c0_9 = arith.constant 0 : index
    %c256 = arith.constant 256 : index
    %9 = vector.load %arg8[%c0_8, %c0_9, %c256] : memref<8x16x384xbf16, #tpu.memory_space<vmem>>, vector<8x16x128xbf16>
    tpu.vector_store %arg8[%c0_8, %c0_9, %c256], %8 {strides = array<i32>} : memref<8x16x384xbf16, #tpu.memory_space<vmem>>, vector<8x16x128xbf16>,
    %c0_10 = arith.constant 0 : index
    %c0_11 = arith.constant 0 : index
    %c0_12 = arith.constant 0 : index
    %10 = vector.load %arg8[%c0_10, %c0_11, %c0_12] : memref<8x16x384xbf16, #tpu.memory_space<vmem>>, vector<8x16x384xbf16>
    %11 = vector.shape_cast %10 : vector<8x16x384xbf16> to vector<128x384xbf16>
    %c0_13 = arith.constant 0 : index
    %c0_14 = arith.constant 0 : index
    %12 = vector.load %arg2[%c0_13, %c0_14] : memref<384x128xbf16, #tpu.memory_space<vmem>>, vector<384x128xbf16>
    %cst_15 = arith.constant dense<0.000000e+00> : vector<128x128xf32>
    %13 = tpu.matmul %11, %12, %cst_15 {dimension_numbers = #tpu.dot_dimension_numbers<[1], [0], [0], [1], [0, 0, 1, 1], [], []>} : vector<128x384xbf16>, vector<384x128xbf16>, vector<128x128xf32> -> vector<128x128xf32>
    %c0_16 = arith.constant 0 : index
    %c0_17 = arith.constant 0 : index
    %14 = vector.load %arg3[%c0_16, %c0_17] : memref<1x128xf32, #tpu.memory_space<vmem>>, vector<1x128xf32>
    %15 = vector.broadcast %14 : vector<1x128xf32> to vector<128x128xf32>
    %16 = arith.addf %13, %15 : vector<128x128xf32>
    %c0_18 = arith.constant 0 : index
    %17 = memref.load %arg6[%c0_18] : memref<1xf32, #tpu.memory_space<smem>>
    %cst_19 = arith.constant 0.000000e+00 : f32
    %18 = vector.broadcast %cst_19 : f32 to vector<128x128xf32>
    %19 = arith.cmpf oge, %16, %18 : vector<128x128xf32>
    %20 = vector.broadcast %17 : f32 to vector<128x128xf32>
    %21 = arith.mulf %20, %16 : vector<128x128xf32>
    %22 = arith.select %19, %16, %21 : vector<128x128xi1>, vector<128x128xf32>
    %23 = vector.shape_cast %22 : vector<128x128xf32> to vector<8x16x128xf32>
    %24 = arith.truncf %23 : vector<8x16x128xf32> to vector<8x16x128xbf16>
    %cst_20 = arith.constant 0.000000e+00 : bf16
    %25 = vector.broadcast %cst_20 : bf16 to vector<8x1x128xbf16>
    %26 = vector.extract_strided_slice %24 {offsets = [0, 0, 0], sizes = [8, 15, 128], strides = [1, 1, 1]} : vector<8x16x128xbf16> to vector<8x15x128xbf16>
    %27 = tpu.concatenate %25, %26 in 1 : vector<8x1x128xbf16>, vector<8x15x128xbf16> -> vector<8x16x128xbf16>
    %c0_21 = arith.constant 0 : index
    %c0_22 = arith.constant 0 : index
    %c0_23 = arith.constant 0 : index
    %28 = vector.load %arg9[%c0_21, %c0_22, %c0_23] : memref<8x16x384xbf16, #tpu.memory_space<vmem>>, vector<8x16x128xbf16>
    tpu.vector_store %arg9[%c0_21, %c0_22, %c0_23], %27 {strides = array<i32>} : memref<8x16x384xbf16, #tpu.memory_space<vmem>>, vector<8x16x128xbf16>,
    %c0_24 = arith.constant 0 : index
    %c0_25 = arith.constant 0 : index
    %c128_26 = arith.constant 128 : index
    %29 = vector.load %arg9[%c0_24, %c0_25, %c128_26] : memref<8x16x384xbf16, #tpu.memory_space<vmem>>, vector<8x16x128xbf16>
    tpu.vector_store %arg9[%c0_24, %c0_25, %c128_26], %24 {strides = array<i32>} : memref<8x16x384xbf16, #tpu.memory_space<vmem>>, vector<8x16x128xbf16>,
    %30 = vector.extract_strided_slice %24 {offsets = [0, 1, 0], sizes = [8, 15, 128], strides = [1, 1, 1]} : vector<8x16x128xbf16> to vector<8x15x128xbf16>
    %cst_27 = arith.constant 0.000000e+00 : bf16
    %31 = vector.broadcast %cst_27 : bf16 to vector<8x1x128xbf16>
    %32 = tpu.concatenate %30, %31 in 1 : vector<8x15x128xbf16>, vector<8x1x128xbf16> -> vector<8x16x128xbf16>
    %c0_28 = arith.constant 0 : index
    %c0_29 = arith.constant 0 : index
    %c256_30 = arith.constant 256 : index
    %33 = vector.load %arg9[%c0_28, %c0_29, %c256_30] : memref<8x16x384xbf16, #tpu.memory_space<vmem>>, vector<8x16x128xbf16>
    tpu.vector_store %arg9[%c0_28, %c0_29, %c256_30], %32 {strides = array<i32>} : memref<8x16x384xbf16, #tpu.memory_space<vmem>>, vector<8x16x128xbf16>,
    %c0_31 = arith.constant 0 : index
    %c0_32 = arith.constant 0 : index
    %c0_33 = arith.constant 0 : index
    %34 = vector.load %arg9[%c0_31, %c0_32, %c0_33] : memref<8x16x384xbf16, #tpu.memory_space<vmem>>, vector<8x16x384xbf16>
    %35 = vector.shape_cast %34 : vector<8x16x384xbf16> to vector<128x384xbf16>
    %c0_34 = arith.constant 0 : index
    %c0_35 = arith.constant 0 : index
    %36 = vector.load %arg4[%c0_34, %c0_35] : memref<384x128xbf16, #tpu.memory_space<vmem>>, vector<384x128xbf16>
    %cst_36 = arith.constant dense<0.000000e+00> : vector<128x128xf32>
    %37 = tpu.matmul %35, %36, %cst_36 {dimension_numbers = #tpu.dot_dimension_numbers<[1], [0], [0], [1], [0, 0, 1, 1], [], []>} : vector<128x384xbf16>, vector<384x128xbf16>, vector<128x128xf32> -> vector<128x128xf32>
    %c0_37 = arith.constant 0 : index
    %c0_38 = arith.constant 0 : index
    %38 = vector.load %arg5[%c0_37, %c0_38] : memref<1x128xf32, #tpu.memory_space<vmem>>, vector<1x128xf32>
    %39 = vector.broadcast %38 : vector<1x128xf32> to vector<128x128xf32>
    %40 = arith.addf %37, %39 : vector<128x128xf32>
    %c0_39 = arith.constant 0 : index
    %c0_40 = arith.constant 0 : index
    %c0_41 = arith.constant 0 : index
    %41 = vector.load %arg1[%c0_39, %c0_40, %c0_41] : memref<8x16x128xbf16, #tpu.memory_space<vmem>>, vector<8x16x128xbf16>
    %42 = vector.shape_cast %41 : vector<8x16x128xbf16> to vector<128x128xbf16>
    %43 = arith.extf %42 : vector<128x128xbf16> to vector<128x128xf32>
    %44 = arith.addf %40, %43 : vector<128x128xf32>
    %45 = vector.shape_cast %44 : vector<128x128xf32> to vector<8x16x128xf32>
    %c0_42 = arith.constant 0 : index
    %c0_43 = arith.constant 0 : index
    %c0_44 = arith.constant 0 : index
    %46 = vector.load %arg7[%c0_42, %c0_43, %c0_44] : memref<8x16x128xf32, #tpu.memory_space<vmem>>, vector<8x16x128xf32>
    tpu.vector_store %arg7[%c0_42, %c0_43, %c0_44], %45 {strides = array<i32>} : memref<8x16x128xf32, #tpu.memory_space<vmem>>, vector<8x16x128xf32>,
    return
  }
  func.func @transform_0(%arg0: i32) -> (i32, i32, i32) {
    %c0_i32 = arith.constant 0 : i32
    %c0_i32_0 = arith.constant 0 : i32
    %c0_i32_1 = arith.constant 0 : i32
    return %arg0, %c0_i32, %c0_i32_0 : i32, i32, i32
  }
  func.func @transform_1(%arg0: i32) -> (i32, i32) {
    %c0_i32 = arith.constant 0 : i32
    %c0_i32_0 = arith.constant 0 : i32
    %c0_i32_1 = arith.constant 0 : i32
    return %c0_i32, %c0_i32_0 : i32, i32
  }
  func.func @transform_2(%arg0: i32) -> (i32, i32) {
    %c0_i32 = arith.constant 0 : i32
    %c0_i32_0 = arith.constant 0 : i32
    %c0_i32_1 = arith.constant 0 : i32
    return %c0_i32, %c0_i32_0 : i32, i32
  }
  func.func @transform_3(%arg0: i32) -> (i32, i32) {
    %c0_i32 = arith.constant 0 : i32
    %c0_i32_0 = arith.constant 0 : i32
    %c0_i32_1 = arith.constant 0 : i32
    return %c0_i32, %c0_i32_0 : i32, i32
  }
  func.func @transform_4(%arg0: i32) -> (i32, i32) {
    %c0_i32 = arith.constant 0 : i32
    %c0_i32_0 = arith.constant 0 : i32
    %c0_i32_1 = arith.constant 0 : i32
    return %c0_i32, %c0_i32_0 : i32, i32
  }
  func.func @transform_5(%arg0: i32) -> i32 {
    %c0_i32 = arith.constant 0 : i32
    %c0_i32_0 = arith.constant 0 : i32
    return %c0_i32 : i32
  }
  func.func @transform_6(%arg0: i32) -> (i32, i32, i32) {
    %c0_i32 = arith.constant 0 : i32
    %c0_i32_0 = arith.constant 0 : i32
    %c0_i32_1 = arith.constant 0 : i32
    return %arg0, %c0_i32, %c0_i32_0 : i32, i32, i32
  }
}

</mosaic_0001>

<llo_original>
// kernel: tpu_custom_call.1
$region0: #{tpu_custom_call.1}
  #allocation0 [shape = 'u32[]', space=smem, size = 0x4, offset = 0x4, fixed_abs, tag = 'smem constant byte address 0x4 - core index']
  #allocation1 [shape = 'u32[72,128]{1,0:T(1,128)}', space=vmem, size = 0x9000, scoped, tag = 'internal scratch']
  #allocation2 [shape = 'bf16[8,16,384]{2,1,0:T(8,128)(2,1)}', space=vmem, size = 0x18000, scoped, tag = 'scratch operand']
  #allocation3 [shape = 'bf16[8,16,384]{2,1,0:T(8,128)(2,1)}', space=vmem, size = 0x18000, scoped, tag = 'scratch operand']
  #allocation4 [shape = 'f32[1]{0:T(128)S(6)}', space=smem, size = 0x200, scoped, tag = 'scoped memory for tpu_custom_call.1']
  %s0 = inlined_call_operand.hbm [shape: bf16[16,16,128], index: 0, kind: input, shape index: {}]
  %s1 = inlined_call_operand.hbm [shape: bf16[384,128], index: 1, kind: input, shape index: {}]
  %s2 = inlined_call_operand.vmem [shape: f32[1,128], index: 2, kind: input, shape index: {}]
  %s3 = inlined_call_operand.hbm [shape: bf16[384,128], index: 3, kind: input, shape index: {}]
  %s4 = inlined_call_operand.vmem [shape: f32[1,128], index: 4, kind: input, shape index: {}]
  %s5 = inlined_call_operand.<no memory space> [shape: f32[1], index: 5, kind: input, shape index: {}]
  %s6 = inlined_call_operand.hbm [shape: f32[16,16,128], index: 6, kind: output, shape index: {}]
  %s7 = sld [smem:[#allocation0]]
  $region69: #{tpu_custom_call.1} parent=0
    _
  %s9 = ssub.s32 1, %s7
  %s10 = scalar_select 0, %s9, %s7
  %11 = sst [smem:[#allocation4]] %s5
  $region1: #{tpu_custom_call.1} parent=0
    #allocation5 [shape = 'u8[65536]{0}', space=vmem, size = 0x10000, scoped, tag = 'input window, operand 0']
    #allocation6 [shape = 's32[2]{0}', space=sflag, size = 0x8, scoped, tag = 'scoped memory for tpu_custom_call.1']
    #allocation7 [shape = 's32[2]{0}', space=sflag, size = 0x8, scoped, tag = 'scoped memory for tpu_custom_call.1']
    #allocation8 [shape = 'u8[98304]{0}', space=vmem, size = 0x18000, scoped, tag = 'input window, operand 1, single buffered']
    #allocation9 [shape = 's32[1]{0}', space=sflag, size = 0x4, scoped, tag = 'scoped memory for tpu_custom_call.1']
    #allocation10 [shape = 'u8[98304]{0}', space=vmem, size = 0x18000, scoped, tag = 'input window, operand 3, single buffered']
    #allocation11 [shape = 'u8[131072]{0}', space=vmem, size = 0x20000, scoped, tag = 'output window, operand 0']
    %12 = vsyncpa [#allocation6], 0
    %s13 = scalar_lea.sflag [#allocation6], 1
    %14 = vsyncpa %s13, 0
    %15 = vsyncpa [#allocation9], 0
    %16 = vsyncpa [#allocation7], 0
    %s17 = scalar_lea.sflag [#allocation7], 1
    %18 = vsyncpa %s17, 0
    loop: start=0, step=1, limit=4
    $region2: #{tpu_custom_call.1} parent=1 // loop_pre_header
      _
    $region3: #{tpu_custom_call.1} parent=1 // loop_header
      %s20 = sphi 0, %s24
      %p21 = scmp.ge.s32.totalorder %s20, 4
      %s30 = sphi 0, %s32
      %s33 = sphi 0, %s30
      %s34 = sphi 0, %s33
      %s50 = sphi 0, %s34
      %s54 = sphi 0, %s54
      %s56 = sphi 0, %s54
      %s57 = sphi 0, %s56
      %s71 = sphi 0, %s57
      %s75 = sphi 0, %s75
      %s77 = sphi 0, %s75
      %s78 = sphi 0, %s77
      %s92 = sphi 0, %s78
      %s96 = sphi 0, %s96
      %s98 = sphi 0, %s96
      %s99 = sphi 0, %s98
      %s113 = sphi 0, %s99
      %s117 = sphi 0, %s117
      %s119 = sphi 0, %s117
      %s120 = sphi 0, %s119
      %s134 = sphi 0, %s120
      %s138 = sphi 0, %s138
      %s140 = sphi 0, %s138
      %s141 = sphi 0, %s140
      %s155 = sphi 0, %s141
      %s161 = sphi 0, %s163
      %s164 = sphi 0, %s161
      %s165 = sphi 0, %s164
      %s181 = sphi 0, %s165
    $region4: #{tpu_custom_call.1} parent=1 // loop_header_branch
      %23 = sbr.rel (%p21) target = $region8
    $region5: #{tpu_custom_call.1} parent=1 // loop_body
      %s25 = ssub.s32 %s20, 1
      %s26 = ssub.s32 %s20, 2
      %s27 = sadd.s32 %s20, 1
      %s28 = ssub.s32 %s20, %s27
      %p29 = scmp.eq.s32.totalorder %s28, 0
      %s31 = sadd.s32 %s30, 1
      %s32 = scalar_select %p29, %s30, %s31
      %p35 = pneg %p29
      %p36 = scmp.eq.s32.totalorder %s20, 1
      %p37 = por %p35, %p36
      %p38 = scmp.ne.s32.totalorder %s30, %s33
      %p39 = scmp.eq.s32.totalorder %s20, 0
      %p40 = por %p38, %p39
      %p41 = scmp.ne.s32.totalorder %s30, %s33
      %p42 = scmp.eq.s32.totalorder %s25, 1
      %p43 = por %p41, %p42
      %p44 = scmp.ne.s32.totalorder %s33, %s34
      %p45 = scmp.eq.s32.totalorder %s25, 0
      %p46 = por %p44, %p45
      %p47 = scmp.ne.s32.totalorder %s33, %s34
      %p48 = scmp.eq.s32.totalorder %s26, 1
      %p49 = por %p47, %p48
      %p51 = scmp.ne.s32.totalorder %s34, %s50
      %p52 = scmp.eq.s32.totalorder %s26, 0
      %p53 = por %p51, %p52
      %s55 = sadd.s32 %s54, 1
      %p58 = scmp.eq.s32.totalorder %s20, 1
      %p59 = scmp.ne.s32.totalorder %s54, %s56
      %p60 = scmp.eq.s32.totalorder %s20, 0
      %p61 = por %p59, %p60
      %p62 = scmp.ne.s32.totalorder %s54, %s56
      %p63 = scmp.eq.s32.totalorder %s25, 1
      %p64 = por %p62, %p63
      %p65 = scmp.ne.s32.totalorder %s56, %s57
      %p66 = scmp.eq.s32.totalorder %s25, 0
      %p67 = por %p65, %p66
      %p68 = scmp.ne.s32.totalorder %s56, %s57
      %p69 = scmp.eq.s32.totalorder %s26, 1
      %p70 = por %p68, %p69
      %p72 = scmp.ne.s32.totalorder %s57, %s71
      %p73 = scmp.eq.s32.totalorder %s26, 0
      %p74 = por %p72, %p73
      %s76 = sadd.s32 %s75, 1
      %p79 = scmp.eq.s32.totalorder %s20, 1
      %p80 = scmp.ne.s32.totalorder %s75, %s77
      %p81 = scmp.eq.s32.totalorder %s20, 0
      %p82 = por %p80, %p81
      %p83 = scmp.ne.s32.totalorder %s75, %s77
      %p84 = scmp.eq.s32.totalorder %s25, 1
      %p85 = por %p83, %p84
      %p86 = scmp.ne.s32.totalorder %s77, %s78
      %p87 = scmp.eq.s32.totalorder %s25, 0
      %p88 = por %p86, %p87
      %p89 = scmp.ne.s32.totalorder %s77, %s78
      %p90 = scmp.eq.s32.totalorder %s26, 1
      %p91 = por %p89, %p90
      %p93 = scmp.ne.s32.totalorder %s78, %s92
      %p94 = scmp.eq.s32.totalorder %s26, 0
      %p95 = por %p93, %p94
      %s97 = sadd.s32 %s96, 1
      %p100 = scmp.eq.s32.totalorder %s20, 1
      %p101 = scmp.ne.s32.totalorder %s96, %s98
      %p102 = scmp.eq.s32.totalorder %s20, 0
      %p103 = por %p101, %p102
      %p104 = scmp.ne.s32.totalorder %s96, %s98
      %p105 = scmp.eq.s32.totalorder %s25, 1
      %p106 = por %p104, %p105
      %p107 = scmp.ne.s32.totalorder %s98, %s99
      %p108 = scmp.eq.s32.totalorder %s25, 0
      %p109 = por %p107, %p108
      %p110 = scmp.ne.s32.totalorder %s98, %s99
      %p111 = scmp.eq.s32.totalorder %s26, 1
      %p112 = por %p110, %p111
      %p114 = scmp.ne.s32.totalorder %s99, %s113
      %p115 = scmp.eq.s32.totalorder %s26, 0
      %p116 = por %p114, %p115
      %s118 = sadd.s32 %s117, 1
      %p121 = scmp.eq.s32.totalorder %s20, 1
      %p122 = scmp.ne.s32.totalorder %s117, %s119
      %p123 = scmp.eq.s32.totalorder %s20, 0
      %p124 = por %p122, %p123
      %p125 = scmp.ne.s32.totalorder %s117, %s119
      %p126 = scmp.eq.s32.totalorder %s25, 1
      %p127 = por %p125, %p126
      %p128 = scmp.ne.s32.totalorder %s119, %s120
      %p129 = scmp.eq.s32.totalorder %s25, 0
      %p130 = por %p128, %p129
      %p131 = scmp.ne.s32.totalorder %s119, %s120
      %p132 = scmp.eq.s32.totalorder %s26, 1
      %p133 = por %p131, %p132
      %p135 = scmp.ne.s32.totalorder %s120, %s134
      %p136 = scmp.eq.s32.totalorder %s26, 0
      %p137 = por %p135, %p136
      %s139 = sadd.s32 %s138, 1
      %p142 = scmp.eq.s32.totalorder %s20, 1
      %p143 = scmp.ne.s32.totalorder %s138, %s140
      %p144 = scmp.eq.s32.totalorder %s20, 0
      %p145 = por %p143, %p144
      %p146 = scmp.ne.s32.totalorder %s138, %s140
      %p147 = scmp.eq.s32.totalorder %s25, 1
      %p148 = por %p146, %p147
      %p149 = scmp.ne.s32.totalorder %s140, %s141
      %p150 = scmp.eq.s32.totalorder %s25, 0
      %p151 = por %p149, %p150
      %p152 = scmp.ne.s32.totalorder %s140, %s141
      %p153 = scmp.eq.s32.totalorder %s26, 1
      %p154 = por %p152, %p153
      %p156 = scmp.ne.s32.totalorder %s141, %s155
      %p157 = scmp.eq.s32.totalorder %s26, 0
      %p158 = por %p156, %p157
      %s159 = ssub.s32 %s20, %s27
      %p160 = scmp.eq.s32.totalorder %s159, 0
      %s162 = sadd.s32 %s161, 1
      %s163 = scalar_select %p160, %s161, %s162
      %p166 = pneg %p160
      %p167 = scmp.eq.s32.totalorder %s20, 1
      %p168 = por %p166, %p167
      %p169 = scmp.ne.s32.totalorder %s161, %s164
      %p170 = scmp.eq.s32.totalorder %s20, 0
      %p171 = por %p169, %p170
      %p172 = scmp.ne.s32.totalorder %s161, %s164
      %p173 = scmp.eq.s32.totalorder %s25, 1
      %p174 = por %p172, %p173
      %p175 = scmp.ne.s32.totalorder %s164, %s165
      %p176 = scmp.eq.s32.totalorder %s25, 0
      %p177 = por %p175, %p176
      %p178 = scmp.ne.s32.totalorder %s164, %s165
      %p179 = scmp.eq.s32.totalorder %s26, 1
      %p180 = por %p178, %p179
      %p182 = scmp.ne.s32.totalorder %s165, %s181
      %p183 = scmp.eq.s32.totalorder %s26, 0
      %p184 = por %p182, %p183
      %p185 = scmp.le.s32.totalorder 1, %s20
      %p186 = scmp.lt.s32.totalorder %s20, 3
      %p187 = pnand %p185, %p186
      %p188 = pneg %p187
      // Predicated region
      $region9: #{tpu_custom_call.1} parent=5 // pred_check
        _
      $region10: #{tpu_custom_call.1} parent=5 // pred_check_branch
        %190 = sbr.rel (%p187) target = $region12
      $region11: #{tpu_custom_call.1} parent=5 // pred_region
        %s191 = ssub.s32 %s20, 1
        // Predicated region
        $region13: #{tpu_custom_call.1} parent=11 // pred_check
          %p192 = pneg %p67
        $region14: #{tpu_custom_call.1} parent=11 // pred_check_branch
          %194 = sbr.rel (%p192) target = $region16
        $region15: #{tpu_custom_call.1} parent=11 // pred_region
          %196 = vsyncadd [#allocation9], 0
          %s197 = sshll.u32 %s1, 4
          %s198 = int_to_ptr.hbm [resolvable:$true] %s197
          %s199 = sshll.u32 [#allocation8], 4
          %s200 = int_to_ptr.vmem [resolvable:$true] %s199
          %205 = dma.hbm_to_vmem [thread:$0]  %s198, 3072, %s200, [#allocation9], 64, 64, 4
        $region16: #{tpu_custom_call.1} parent=11 // pred_fallthru
          _
        // Predicated region
        $region17: #{tpu_custom_call.1} parent=11 // pred_check
          %p206 = pneg %p88
        $region18: #{tpu_custom_call.1} parent=11 // pred_check_branch
          %208 = sbr.rel (%p206) target = $region20
        $region19: #{tpu_custom_call.1} parent=11 // pred_region
          _
        $region20: #{tpu_custom_call.1} parent=11 // pred_fallthru
          _
        // Predicated region
        $region21: #{tpu_custom_call.1} parent=11 // pred_check
          %p209 = pneg %p109
        $region22: #{tpu_custom_call.1} parent=11 // pred_check_branch
          %211 = sbr.rel (%p209) target = $region24
        $region23: #{tpu_custom_call.1} parent=11 // pred_region
          %213 = vsyncadd [#allocation9], 0
          %s214 = sshll.u32 %s3, 4
          %s215 = int_to_ptr.hbm [resolvable:$true] %s214
          %s216 = sshll.u32 [#allocation10], 4
          %s217 = int_to_ptr.vmem [resolvable:$true] %s216
          %222 = dma.hbm_to_vmem [thread:$0]  %s215, 3072, %s217, [#allocation9], 64, 64, 4
        $region24: #{tpu_custom_call.1} parent=11 // pred_fallthru
          _
        // Predicated region
        $region25: #{tpu_custom_call.1} parent=11 // pred_check
          %p223 = pneg %p130
        $region26: #{tpu_custom_call.1} parent=11 // pred_check_branch
          %225 = sbr.rel (%p223) target = $region28
        $region27: #{tpu_custom_call.1} parent=11 // pred_region
          _
        $region28: #{tpu_custom_call.1} parent=11 // pred_fallthru
          _
        // Predicated region
        $region29: #{tpu_custom_call.1} parent=11 // pred_check
          %p226 = pneg %p151
        $region30: #{tpu_custom_call.1} parent=11 // pred_check_branch
          %228 = sbr.rel (%p226) target = $region32
        $region31: #{tpu_custom_call.1} parent=11 // pred_region
          _
        $region32: #{tpu_custom_call.1} parent=11 // pred_fallthru
          _
      $region12: #{tpu_custom_call.1} parent=5 // pred_fallthru
        _
      %p229 = scmp.lt.s32.totalorder %s20, 2
      // Predicated region
      $region33: #{tpu_custom_call.1} parent=5 // pred_check
        %p230 = pneg %p229
      $region34: #{tpu_custom_call.1} parent=5 // pred_check_branch
        %232 = sbr.rel (%p230) target = $region36
      $region35: #{tpu_custom_call.1} parent=5 // pred_region
        // Predicated region
        $region37: #{tpu_custom_call.1} parent=35 // pred_check
          %p233 = pneg %p40
        $region38: #{tpu_custom_call.1} parent=35 // pred_check_branch
          %235 = sbr.rel (%p233) target = $region40
        $region39: #{tpu_custom_call.1} parent=35 // pred_region
          %s236 = sand.u32 %s30, 1
          %s237 = scalar_lea.sflag [#allocation6], %s236
          %s238 = sand.u32 %s30, 1
          %s239 = smul.addr %s238, 64
          %s240 = scalar_lea.vmem [#allocation5], %s239
          %s241 = smul.u32 8, %s20
          %243 = vsyncadd %s237, 0
          %s244 = smul.addr %s241, 2
          %s245 = smul.addr %s244, 4
          %s246 = scalar_lea.hbm %s0, %s245
          %s247 = sshll.u32 %s246, 4
          %s248 = int_to_ptr.hbm [resolvable:$true] %s247
          %s249 = sshll.u32 %s240, 4
          %s250 = int_to_ptr.vmem [resolvable:$true] %s249
          %255 = dma.hbm_to_vmem [thread:$0]  %s248, 1024, %s250, %s237, 64, 64, 4
        $region40: #{tpu_custom_call.1} parent=35 // pred_fallthru
          _
      $region36: #{tpu_custom_call.1} parent=5 // pred_fallthru
        _
      %p256 = scmp.le.s32.totalorder 1, %s20
      %p257 = scmp.lt.s32.totalorder %s20, 3
      %p258 = pnand %p256, %p257
      %p259 = pneg %p258
      // Predicated region
      $region41: #{tpu_custom_call.1} parent=5 // pred_check
        _
      $region42: #{tpu_custom_call.1} parent=5 // pred_check_branch
        %261 = sbr.rel (%p258) target = $region44
      $region43: #{tpu_custom_call.1} parent=5 // pred_region
        %s262 = ssub.s32 %s20, 1
        %s263 = sand.u32 %s33, 1
        %s264 = scalar_lea.sflag [#allocation6], %s263
        %s265 = sand.u32 %s33, 1
        %s266 = smul.addr %s265, 64
        %s267 = scalar_lea.vmem [#allocation5], %s266
        // Predicated region
        $region45: #{tpu_custom_call.1} parent=43 // pred_check
          %p268 = pneg %p46
        $region46: #{tpu_custom_call.1} parent=43 // pred_check_branch
          %270 = sbr.rel (%p268) target = $region48
        $region47: #{tpu_custom_call.1} parent=43 // pred_region
          %272 = dma.done %s264, 1024
        $region48: #{tpu_custom_call.1} parent=43 // pred_fallthru
          _
        // Predicated region
        $region49: #{tpu_custom_call.1} parent=43 // pred_check
          %p273 = pneg %p67
        $region50: #{tpu_custom_call.1} parent=43 // pred_check_branch
          %275 = sbr.rel (%p273) target = $region52
        $region51: #{tpu_custom_call.1} parent=43 // pred_region
          %277 = dma.done [#allocation9], 3072
        $region52: #{tpu_custom_call.1} parent=43 // pred_fallthru
          _
        // Predicated region
        $region53: #{tpu_custom_call.1} parent=43 // pred_check
          %p278 = pneg %p109
        $region54: #{tpu_custom_call.1} parent=43 // pred_check_branch
          %280 = sbr.rel (%p278) target = $region56
        $region55: #{tpu_custom_call.1} parent=43 // pred_region
          %282 = dma.done [#allocation9], 3072
        $region56: #{tpu_custom_call.1} parent=43 // pred_fallthru
          _
        %s283 = sand.u32 %s33, 1
        %s284 = scalar_lea.sflag [#allocation6], %s283
        %s285 = sand.u32 %s33, 1
        %s286 = smul.addr %s285, 64
        %s287 = scalar_lea.vmem [#allocation5], %s286
        %p288 = pneg %p46
        %p289 = pneg %p43
        %p290 = pneg %p67
        %p291 = pneg %p64
        %p292 = pneg %p88
        %p293 = pneg %p85
        %p294 = pneg %p109
        %p295 = pneg %p106
        %p296 = pneg %p130
        %p297 = pneg %p127
        %p298 = pneg %p151
        %p299 = pneg %p148
        %p300 = pneg %p177
        %p301 = pneg %p174
        %s302 = sand.u32 %s164, 1
        %s303 = scalar_lea.sflag [#allocation7], %s302
        %s304 = sand.u32 %s164, 1
        %s305 = smul.addr %s304, 128
        %s306 = scalar_lea.vmem [#allocation11], %s305
        %s307 = smul.u32 8, %s25
        %s308 = smul.u32 8, %s25
        %v310 = vld [vmem:[%s267] sm:$0xf]
        %v311 = vld [vmem:[%s267 + $0x4] sm:$0xf]
        %v312 = vld [vmem:[%s267 + $0x8] sm:$0xf]
        %v313 = vld [vmem:[%s267 + $0xc] sm:$0xf]
        %v314 = vld [vmem:[%s267 + $0x10] sm:$0xf]
        %v315 = vld [vmem:[%s267 + $0x14] sm:$0xf]
        %v316 = vld [vmem:[%s267 + $0x18] sm:$0xf]
        %v317 = vld [vmem:[%s267 + $0x1c] sm:$0xf]
        %v318 = vld [vmem:[%s267 + $0x20] sm:$0xf]
        %v319 = vld [vmem:[%s267 + $0x24] sm:$0xf]
        %v320 = vld [vmem:[%s267 + $0x28] sm:$0xf]
        %v321 = vld [vmem:[%s267 + $0x2c] sm:$0xf]
        %v322 = vld [vmem:[%s267 + $0x30] sm:$0xf]
        %v323 = vld [vmem:[%s267 + $0x34] sm:$0xf]
        %v324 = vld [vmem:[%s267 + $0x38] sm:$0xf]
        %v325 = vld [vmem:[%s267 + $0x3c] sm:$0xf]
        %v342 = vunpack.c.l.b16 %v310
        %v343 = vunpack.c.l.b16 %v311
        %v344 = vunpack.c.l.b16 %v312
        %v345 = vunpack.c.l.b16 %v313
        %v346 = vunpack.c.l.b16 %v314
        %v347 = vunpack.c.l.b16 %v315
        %v348 = vunpack.c.l.b16 %v316
        %v349 = vunpack.c.l.b16 %v317
        %v350 = vunpack.c.l.b16 %v318
        %v351 = vunpack.c.l.b16 %v319
        %v352 = vunpack.c.l.b16 %v320
        %v353 = vunpack.c.l.b16 %v321
        %v354 = vunpack.c.l.b16 %v322
        %v355 = vunpack.c.l.b16 %v323
        %v356 = vunpack.c.l.b16 %v324
        %v357 = vunpack.c.l.b16 %v325
        %v358 = vpack.c.b16 %v343, %v342
        %v359 = vpack.c.b16 %v345, %v344
        %v360 = vpack.c.b16 %v347, %v346
        %v361 = vpack.c.b16 %v349, %v348
        %v362 = vpack.c.b16 %v351, %v350
        %v363 = vpack.c.b16 %v353, %v352
        %v364 = vpack.c.b16 %v355, %v354
        %v365 = vpack.c.b16 %v357, %v356
        %v367 = vshrl.u32 %v358, 16
        %v369 = vrot.slane %v367, 7
        %v370 = vshll.u32 %v358, 16
        %v372 = vor.u32 %v369, %v370
        %v374 = vshrl.u32 %v359, 16
        %v376 = vrot.slane %v374, 7
        %v377 = vshll.u32 %v359, 16
        %v379 = vor.u32 %v376, %v377
        %v381 = vshrl.u32 %v360, 16
        %v383 = vrot.slane %v381, 7
        %v384 = vshll.u32 %v360, 16
        %v386 = vor.u32 %v383, %v384
        %v388 = vshrl.u32 %v361, 16
        %v390 = vrot.slane %v388, 7
        %v391 = vshll.u32 %v361, 16
        %v393 = vor.u32 %v390, %v391
        %v395 = vshrl.u32 %v362, 16
        %v397 = vrot.slane %v395, 7
        %v398 = vshll.u32 %v362, 16
        %v400 = vor.u32 %v397, %v398
        %v402 = vshrl.u32 %v363, 16
        %v404 = vrot.slane %v402, 7
        %v405 = vshll.u32 %v363, 16
        %v407 = vor.u32 %v404, %v405
        %v409 = vshrl.u32 %v364, 16
        %v411 = vrot.slane %v409, 7
        %v412 = vshll.u32 %v364, 16
        %v414 = vor.u32 %v411, %v412
        %v416 = vshrl.u32 %v365, 16
        %v418 = vrot.slane %v416, 7
        %v419 = vshll.u32 %v365, 16
        %v421 = vor.u32 %v418, %v419
        %vm430 = vcmask 1040384
        %vm431 = vsmask.f32 256
        %vm432 = vmand %vm430, %vm431
        %v433 = vsel %vm432, 0, %v372
        %v434 = vsel %vm432, 0, %v379
        %v435 = vsel %vm432, 0, %v386
        %v436 = vsel %vm432, 0, %v393
        %v437 = vsel %vm432, 0, %v400
        %v438 = vsel %vm432, 0, %v407
        %v439 = vsel %vm432, 0, %v414
        %v440 = vsel %vm432, 0, %v421
        %v449 = vunpack.c.l.b16 %v433
        %v450 = vunpack.c.h.b16 %v433
        %v451 = vunpack.c.l.b16 %v434
        %v452 = vunpack.c.h.b16 %v434
        %v453 = vunpack.c.l.b16 %v435
        %v454 = vunpack.c.h.b16 %v435
        %v455 = vunpack.c.l.b16 %v436
        %v456 = vunpack.c.h.b16 %v436
        %v457 = vunpack.c.l.b16 %v437
        %v458 = vunpack.c.h.b16 %v437
        %v459 = vunpack.c.l.b16 %v438
        %v460 = vunpack.c.h.b16 %v438
        %v461 = vunpack.c.l.b16 %v439
        %v462 = vunpack.c.h.b16 %v439
        %v463 = vunpack.c.l.b16 %v440
        %v464 = vunpack.c.h.b16 %v440
        %v465 = vpack.c.b16 %v449, %v449
        %v466 = vpack.c.b16 %v450, %v450
        %v467 = vpack.c.b16 %v451, %v451
        %v468 = vpack.c.b16 %v452, %v452
        %v469 = vpack.c.b16 %v453, %v453
        %v470 = vpack.c.b16 %v454, %v454
        %v471 = vpack.c.b16 %v455, %v455
        %v472 = vpack.c.b16 %v456, %v456
        %v473 = vpack.c.b16 %v457, %v457
        %v474 = vpack.c.b16 %v458, %v458
        %v475 = vpack.c.b16 %v459, %v459
        %v476 = vpack.c.b16 %v460, %v460
        %v477 = vpack.c.b16 %v461, %v461
        %v478 = vpack.c.b16 %v462, %v462
        %v479 = vpack.c.b16 %v463, %v463
        %v480 = vpack.c.b16 %v464, %v464
        %497 = vst [vmem:[#allocation2] sm:$0xf] %v465
        %498 = vst [vmem:[#allocation2 + $0xc] sm:$0xf] %v466
        %499 = vst [vmem:[#allocation2 + $0x18] sm:$0xf] %v467
        %500 = vst [vmem:[#allocation2 + $0x24] sm:$0xf] %v468
        %501 = vst [vmem:[#allocation2 + $0x30] sm:$0xf] %v469
        %502 = vst [vmem:[#allocation2 + $0x3c] sm:$0xf] %v470
        %503 = vst [vmem:[#allocation2 + $0x48] sm:$0xf] %v471
        %504 = vst [vmem:[#allocation2 + $0x54] sm:$0xf] %v472
        %505 = vst [vmem:[#allocation2 + $0x60] sm:$0xf] %v473
        %506 = vst [vmem:[#allocation2 + $0x6c] sm:$0xf] %v474
        %507 = vst [vmem:[#allocation2 + $0x78] sm:$0xf] %v475
        %508 = vst [vmem:[#allocation2 + $0x84] sm:$0xf] %v476
        %509 = vst [vmem:[#allocation2 + $0x90] sm:$0xf] %v477
        %510 = vst [vmem:[#allocation2 + $0x9c] sm:$0xf] %v478
        %511 = vst [vmem:[#allocation2 + $0xa8] sm:$0xf] %v479
        %512 = vst [vmem:[#allocation2 + $0xb4] sm:$0xf] %v480
        %513 = vst [vmem:[#allocation2 + $0x4] sm:$0xf] %v310
        %514 = vst [vmem:[#allocation2 + $0x10] sm:$0xf] %v311
        %515 = vst [vmem:[#allocation2 + $0x1c] sm:$0xf] %v312
        %516 = vst [vmem:[#allocation2 + $0x28] sm:$0xf] %v313
        %517 = vst [vmem:[#allocation2 + $0x34] sm:$0xf] %v314
        %518 = vst [vmem:[#allocation2 + $0x40] sm:$0xf] %v315
        %519 = vst [vmem:[#allocation2 + $0x4c] sm:$0xf] %v316
        %520 = vst [vmem:[#allocation2 + $0x58] sm:$0xf] %v317
        %521 = vst [vmem:[#allocation2 + $0x64] sm:$0xf] %v318
        %522 = vst [vmem:[#allocation2 + $0x70] sm:$0xf] %v319
        %523 = vst [vmem:[#allocation2 + $0x7c] sm:$0xf] %v320
        %524 = vst [vmem:[#allocation2 + $0x88] sm:$0xf] %v321
        %525 = vst [vmem:[#allocation2 + $0x94] sm:$0xf] %v322
        %526 = vst [vmem:[#allocation2 + $0xa0] sm:$0xf] %v323
        %527 = vst [vmem:[#allocation2 + $0xac] sm:$0xf] %v324
        %528 = vst [vmem:[#allocation2 + $0xb8] sm:$0xf] %v325
        %v529 = vrot.slane %v370, 1
        %v530 = vor.u32 %v367, %v529
        %v531 = vrot.slane %v377, 1
        %v532 = vor.u32 %v374, %v531
        %v533 = vrot.slane %v384, 1
        %v534 = vor.u32 %v381, %v533
        %v535 = vrot.slane %v391, 1
        %v536 = vor.u32 %v388, %v535
        %v537 = vrot.slane %v398, 1
        %v538 = vor.u32 %v395, %v537
        %v539 = vrot.slane %v405, 1
        %v540 = vor.u32 %v402, %v539
        %v541 = vrot.slane %v412, 1
        %v542 = vor.u32 %v409, %v541
        %v543 = vrot.slane %v419, 1
        %v544 = vor.u32 %v416, %v543
        %vm553 = vcmask 1047552
        %vm554 = vsmask.f32 7424
        %vm555 = vmand %vm553, %vm554
        %v556 = vsel %vm555, %v530, 0
        %v557 = vsel %vm555, %v532, 0
        %v558 = vsel %vm555, %v534, 0
        %v559 = vsel %vm555, %v536, 0
        %v560 = vsel %vm555, %v538, 0
        %v561 = vsel %vm555, %v540, 0
        %v562 = vsel %vm555, %v542, 0
        %v563 = vsel %vm555, %v544, 0
        %v572 = vunpack.c.l.b16 %v556
        %v573 = vunpack.c.h.b16 %v556
        %v574 = vunpack.c.l.b16 %v557
        %v575 = vunpack.c.h.b16 %v557
        %v576 = vunpack.c.l.b16 %v558
        %v577 = vunpack.c.h.b16 %v558
        %v578 = vunpack.c.l.b16 %v559
        %v579 = vunpack.c.h.b16 %v559
        %v580 = vunpack.c.l.b16 %v560
        %v581 = vunpack.c.h.b16 %v560
        %v582 = vunpack.c.l.b16 %v561
        %v583 = vunpack.c.h.b16 %v561
        %v584 = vunpack.c.l.b16 %v562
        %v585 = vunpack.c.h.b16 %v562
        %v586 = vunpack.c.l.b16 %v563
        %v587 = vunpack.c.h.b16 %v563
        %v588 = vpack.c.b16 %v572, %v572
        %v589 = vpack.c.b16 %v573, %v573
        %v590 = vpack.c.b16 %v574, %v574
        %v591 = vpack.c.b16 %v575, %v575
        %v592 = vpack.c.b16 %v576, %v576
        %v593 = vpack.c.b16 %v577, %v577
        %v594 = vpack.c.b16 %v578, %v578
        %v595 = vpack.c.b16 %v579, %v579
        %v596 = vpack.c.b16 %v580, %v580
        %v597 = vpack.c.b16 %v581, %v581
        %v598 = vpack.c.b16 %v582, %v582
        %v599 = vpack.c.b16 %v583, %v583
        %v600 = vpack.c.b16 %v584, %v584
        %v601 = vpack.c.b16 %v585, %v585
        %v602 = vpack.c.b16 %v586, %v586
        %v603 = vpack.c.b16 %v587, %v587
        %620 = vst [vmem:[#allocation2 + $0x8] sm:$0xf] %v588
        %621 = vst [vmem:[#allocation2 + $0x14] sm:$0xf] %v589
        %622 = vst [vmem:[#allocation2 + $0x20] sm:$0xf] %v590
        %623 = vst [vmem:[#allocation2 + $0x2c] sm:$0xf] %v591
        %624 = vst [vmem:[#allocation2 + $0x38] sm:$0xf] %v592
        %625 = vst [vmem:[#allocation2 + $0x44] sm:$0xf] %v593
        %626 = vst [vmem:[#allocation2 + $0x50] sm:$0xf] %v594
        %627 = vst [vmem:[#allocation2 + $0x5c] sm:$0xf] %v595
        %628 = vst [vmem:[#allocation2 + $0x68] sm:$0xf] %v596
        %629 = vst [vmem:[#allocation2 + $0x74] sm:$0xf] %v597
        %630 = vst [vmem:[#allocation2 + $0x80] sm:$0xf] %v598
        %631 = vst [vmem:[#allocation2 + $0x8c] sm:$0xf] %v599
        %632 = vst [vmem:[#allocation2 + $0x98] sm:$0xf] %v600
        %633 = vst [vmem:[#allocation2 + $0xa4] sm:$0xf] %v601
        %634 = vst [vmem:[#allocation2 + $0xb0] sm:$0xf] %v602
        %635 = vst [vmem:[#allocation2 + $0xbc] sm:$0xf] %v603
        %v636 = vld [vmem:[#allocation2] sm:$0xff]
        %v637 = vld [vmem:[#allocation2 + $0x8] sm:$0xf]
        %v638 = vld [vmem:[#allocation2 + $0xc] sm:$0xff]
        %v639 = vld [vmem:[#allocation2 + $0x14] sm:$0xf]
        %v640 = vld [vmem:[#allocation2 + $0x18] sm:$0xff]
        %v641 = vld [vmem:[#allocation2 + $0x20] sm:$0xf]
        %v642 = vld [vmem:[#allocation2 + $0x24] sm:$0xff]
        %v643 = vld [vmem:[#allocation2 + $0x2c] sm:$0xf]
        %v644 = vld [vmem:[#allocation2 + $0x30] sm:$0xff]
        %v645 = vld [vmem:[#allocation2 + $0x38] sm:$0xf]
        %v646 = vld [vmem:[#allocation2 + $0x3c] sm:$0xff]
        %v647 = vld [vmem:[#allocation2 + $0x44] sm:$0xf]
        %v648 = vld [vmem:[#allocation2 + $0x48] sm:$0xff]
        %v649 = vld [vmem:[#allocation2 + $0x50] sm:$0xf]
        %v650 = vld [vmem:[#allocation2 + $0x54] sm:$0xff]
        %v651 = vld [vmem:[#allocation2 + $0x5c] sm:$0xf]
        %v652 = vld [vmem:[#allocation2 + $0x60] sm:$0xff]
        %v653 = vld [vmem:[#allocation2 + $0x68] sm:$0xf]
        %v654 = vld [vmem:[#allocation2 + $0x6c] sm:$0xff]
        %v655 = vld [vmem:[#allocation2 + $0x74] sm:$0xf]
        %v656 = vld [vmem:[#allocation2 + $0x78] sm:$0xff]
        %v657 = vld [vmem:[#allocation2 + $0x80] sm:$0xf]
        %v658 = vld [vmem:[#allocation2 + $0x84] sm:$0xff]
        %v659 = vld [vmem:[#allocation2 + $0x8c] sm:$0xf]
        %v660 = vld [vmem:[#allocation2 + $0x90] sm:$0xff]
        %v661 = vld [vmem:[#allocation2 + $0x98] sm:$0xf]
        %v662 = vld [vmem:[#allocation2 + $0x9c] sm:$0xff]
        %v663 = vld [vmem:[#allocation2 + $0xa4] sm:$0xf]
        %v664 = vld [vmem:[#allocation2 + $0xa8] sm:$0xff]
        %v665 = vld [vmem:[#allocation2 + $0xb0] sm:$0xf]
        %v666 = vld [vmem:[#allocation2 + $0xb4] sm:$0xff]
        %v667 = vld [vmem:[#allocation2 + $0xbc] sm:$0xf]
        %v668 = vld [vmem:[#allocation8] sm:$0xf]
        %v669 = vld [vmem:[#allocation8 + $0x4] sm:$0xf]
        %v670 = vld [vmem:[#allocation8 + $0x8] sm:$0xf]
        %v671 = vld [vmem:[#allocation8 + $0xc] sm:$0xf]
        %v672 = vld [vmem:[#allocation8 + $0x10] sm:$0xf]
        %v673 = vld [vmem:[#allocation8 + $0x14] sm:$0xf]
        %v674 = vld [vmem:[#allocation8 + $0x18] sm:$0xf]
        %v675 = vld [vmem:[#allocation8 + $0x1c] sm:$0xf]
        %v676 = vld [vmem:[#allocation8 + $0x20] sm:$0xf]
        %v677 = vld [vmem:[#allocation8 + $0x24] sm:$0xf]
        %v678 = vld [vmem:[#allocation8 + $0x28] sm:$0xf]
        %v679 = vld [vmem:[#allocation8 + $0x2c] sm:$0xf]
        %v680 = vld [vmem:[#allocation8 + $0x30] sm:$0xf]
        %v681 = vld [vmem:[#allocation8 + $0x34] sm:$0xf]
        %v682 = vld [vmem:[#allocation8 + $0x38] sm:$0xf]
        %v683 = vld [vmem:[#allocation8 + $0x3c] sm:$0xf]
        %v684 = vld [vmem:[#allocation8 + $0x40] sm:$0xf]
        %v685 = vld [vmem:[#allocation8 + $0x44] sm:$0xf]
        %v686 = vld [vmem:[#allocation8 + $0x48] sm:$0xf]
        %v687 = vld [vmem:[#allocation8 + $0x4c] sm:$0xf]
        %v688 = vld [vmem:[#allocation8 + $0x50] sm:$0xf]
        %v689 = vld [vmem:[#allocation8 + $0x54] sm:$0xf]
        %v690 = vld [vmem:[#allocation8 + $0x58] sm:$0xf]
        %v691 = vld [vmem:[#allocation8 + $0x5c] sm:$0xf]
        %v692 = vld [vmem:[#allocation8 + $0x60] sm:$0xf]
        %v693 = vld [vmem:[#allocation8 + $0x64] sm:$0xf]
        %v694 = vld [vmem:[#allocation8 + $0x68] sm:$0xf]
        %v695 = vld [vmem:[#allocation8 + $0x6c] sm:$0xf]
        %v696 = vld [vmem:[#allocation8 + $0x70] sm:$0xf]
        %v697 = vld [vmem:[#allocation8 + $0x74] sm:$0xf]
        %v698 = vld [vmem:[#allocation8 + $0x78] sm:$0xf]
        %v699 = vld [vmem:[#allocation8 + $0x7c] sm:$0xf]
        %v700 = vld [vmem:[#allocation8 + $0x80] sm:$0xf]
        %v701 = vld [vmem:[#allocation8 + $0x84] sm:$0xf]
        %v702 = vld [vmem:[#allocation8 + $0x88] sm:$0xf]
        %v703 = vld [vmem:[#allocation8 + $0x8c] sm:$0xf]
        %v704 = vld [vmem:[#allocation8 + $0x90] sm:$0xf]
        %v705 = vld [vmem:[#allocation8 + $0x94] sm:$0xf]
        %v706 = vld [vmem:[#allocation8 + $0x98] sm:$0xf]
        %v707 = vld [vmem:[#allocation8 + $0x9c] sm:$0xf]
        %v708 = vld [vmem:[#allocation8 + $0xa0] sm:$0xf]
        %v709 = vld [vmem:[#allocation8 + $0xa4] sm:$0xf]
        %v710 = vld [vmem:[#allocation8 + $0xa8] sm:$0xf]
        %v711 = vld [vmem:[#allocation8 + $0xac] sm:$0xf]
        %v712 = vld [vmem:[#allocation8 + $0xb0] sm:$0xf]
        %v713 = vld [vmem:[#allocation8 + $0xb4] sm:$0xf]
        %v714 = vld [vmem:[#allocation8 + $0xb8] sm:$0xf]
        %v715 = vld [vmem:[#allocation8 + $0xbc] sm:$0xf]
        %v716 = vld [vmem:[%s2] sm:$0x1]
        %v718 = vperm.slane %v716, 0
        %v752 = vunpack.c.l.b16 %v636
        %v753 = vunpack.c.h.b16 %v636
        %v754 = vunpack.c.l.b16 %v637
        %v755 = vunpack.c.l.b16 %v638
        %v756 = vunpack.c.h.b16 %v638
        %v757 = vunpack.c.l.b16 %v639
        %v758 = vunpack.c.l.b16 %v640
        %v759 = vunpack.c.h.b16 %v640
        %v760 = vunpack.c.l.b16 %v641
        %v761 = vunpack.c.l.b16 %v642
        %v762 = vunpack.c.h.b16 %v642
        %v763 = vunpack.c.l.b16 %v643
        %v764 = vunpack.c.l.b16 %v644
        %v765 = vunpack.c.h.b16 %v644
        %v766 = vunpack.c.l.b16 %v645
        %v767 = vunpack.c.l.b16 %v646
        %v768 = vunpack.c.h.b16 %v646
        %v769 = vunpack.c.l.b16 %v647
        %v770 = vunpack.c.l.b16 %v648
        %v771 = vunpack.c.h.b16 %v648
        %v772 = vunpack.c.l.b16 %v649
        %v773 = vunpack.c.l.b16 %v650
        %v774 = vunpack.c.h.b16 %v650
        %v775 = vunpack.c.l.b16 %v651
        %v776 = vunpack.c.l.b16 %v652
        %v777 = vunpack.c.h.b16 %v652
        %v778 = vunpack.c.l.b16 %v653
        %v779 = vunpack.c.l.b16 %v654
        %v780 = vunpack.c.h.b16 %v654
        %v781 = vunpack.c.l.b16 %v655
        %v782 = vunpack.c.l.b16 %v656
        %v783 = vunpack.c.h.b16 %v656
        %v784 = vunpack.c.l.b16 %v657
        %v785 = vunpack.c.l.b16 %v658
        %v786 = vunpack.c.h.b16 %v658
        %v787 = vunpack.c.l.b16 %v659
        %v788 = vunpack.c.l.b16 %v660
        %v789 = vunpack.c.h.b16 %v660
        %v790 = vunpack.c.l.b16 %v661
        %v791 = vunpack.c.l.b16 %v662
        %v792 = vunpack.c.h.b16 %v662
        %v793 = vunpack.c.l.b16 %v663
        %v794 = vunpack.c.l.b16 %v664
        %v795 = vunpack.c.h.b16 %v664
        %v796 = vunpack.c.l.b16 %v665
        %v797 = vunpack.c.l.b16 %v666
        %v798 = vunpack.c.h.b16 %v666
        %v799 = vunpack.c.l.b16 %v667
        %v800 = vpack.c.b16 %v755, %v752
        %v801 = vpack.c.b16 %v756, %v753
        %v802 = vpack.c.b16 %v757, %v754
        %v803 = vpack.c.b16 %v761, %v758
        %v804 = vpack.c.b16 %v762, %v759
        %v805 = vpack.c.b16 %v763, %v760
        %v806 = vpack.c.b16 %v767, %v764
        %v807 = vpack.c.b16 %v768, %v765
        %v808 = vpack.c.b16 %v769, %v766
        %v809 = vpack.c.b16 %v773, %v770
        %v810 = vpack.c.b16 %v774, %v771
        %v811 = vpack.c.b16 %v775, %v772
        %v812 = vpack.c.b16 %v779, %v776
        %v813 = vpack.c.b16 %v780, %v777
        %v814 = vpack.c.b16 %v781, %v778
        %v815 = vpack.c.b16 %v785, %v782
        %v816 = vpack.c.b16 %v786, %v783
        %v817 = vpack.c.b16 %v787, %v784
        %v818 = vpack.c.b16 %v791, %v788
        %v819 = vpack.c.b16 %v792, %v789
        %v820 = vpack.c.b16 %v793, %v790
        %v821 = vpack.c.b16 %v797, %v794
        %v822 = vpack.c.b16 %v798, %v795
        %v823 = vpack.c.b16 %v799, %v796
        %v896 = vunpack.c.l.b16 %v668
        %v897 = vunpack.c.l.b16 %v669
        %v898 = vunpack.c.l.b16 %v670
        %v899 = vunpack.c.l.b16 %v671
        %v900 = vunpack.c.l.b16 %v672
        %v901 = vunpack.c.l.b16 %v673
        %v902 = vunpack.c.l.b16 %v674
        %v903 = vunpack.c.l.b16 %v675
        %v904 = vunpack.c.l.b16 %v676
        %v905 = vunpack.c.l.b16 %v677
        %v906 = vunpack.c.l.b16 %v678
        %v907 = vunpack.c.l.b16 %v679
        %v908 = vunpack.c.l.b16 %v680
        %v909 = vunpack.c.l.b16 %v681
        %v910 = vunpack.c.l.b16 %v682
        %v911 = vunpack.c.l.b16 %v683
        %v912 = vunpack.c.l.b16 %v684
        %v913 = vunpack.c.l.b16 %v685
        %v914 = vunpack.c.l.b16 %v686
        %v915 = vunpack.c.l.b16 %v687
        %v916 = vunpack.c.l.b16 %v688
        %v917 = vunpack.c.l.b16 %v689
        %v918 = vunpack.c.l.b16 %v690
        %v919 = vunpack.c.l.b16 %v691
        %v920 = vunpack.c.l.b16 %v692
        %v921 = vunpack.c.l.b16 %v693
        %v922 = vunpack.c.l.b16 %v694
        %v923 = vunpack.c.l.b16 %v695
        %v924 = vunpack.c.l.b16 %v696
        %v925 = vunpack.c.l.b16 %v697
        %v926 = vunpack.c.l.b16 %v698
        %v927 = vunpack.c.l.b16 %v699
        %v928 = vunpack.c.l.b16 %v700
        %v929 = vunpack.c.l.b16 %v701
        %v930 = vunpack.c.l.b16 %v702
        %v931 = vunpack.c.l.b16 %v703
        %v932 = vunpack.c.l.b16 %v704
        %v933 = vunpack.c.l.b16 %v705
        %v934 = vunpack.c.l.b16 %v706
        %v935 = vunpack.c.l.b16 %v707
        %v936 = vunpack.c.l.b16 %v708
        %v937 = vunpack.c.l.b16 %v709
        %v938 = vunpack.c.l.b16 %v710
        %v939 = vunpack.c.l.b16 %v711
        %v940 = vunpack.c.l.b16 %v712
        %v941 = vunpack.c.l.b16 %v713
        %v942 = vunpack.c.l.b16 %v714
        %v943 = vunpack.c.l.b16 %v715
        %v944 = vpack.c.b16 %v897, %v896
        %v945 = vpack.c.b16 %v899, %v898
        %v946 = vpack.c.b16 %v901, %v900
        %v947 = vpack.c.b16 %v903, %v902
        %v948 = vpack.c.b16 %v905, %v904
        %v949 = vpack.c.b16 %v907, %v906
        %v950 = vpack.c.b16 %v909, %v908
        %v951 = vpack.c.b16 %v911, %v910
        %v952 = vpack.c.b16 %v913, %v912
        %v953 = vpack.c.b16 %v915, %v914
        %v954 = vpack.c.b16 %v917, %v916
        %v955 = vpack.c.b16 %v919, %v918
        %v956 = vpack.c.b16 %v921, %v920
        %v957 = vpack.c.b16 %v923, %v922
        %v958 = vpack.c.b16 %v925, %v924
        %v959 = vpack.c.b16 %v927, %v926
        %v960 = vpack.c.b16 %v929, %v928
        %v961 = vpack.c.b16 %v931, %v930
        %v962 = vpack.c.b16 %v933, %v932
        %v963 = vpack.c.b16 %v935, %v934
        %v964 = vpack.c.b16 %v937, %v936
        %v965 = vpack.c.b16 %v939, %v938
        %v966 = vpack.c.b16 %v941, %v940
        %v967 = vpack.c.b16 %v943, %v942
        %992 = vmatpush.bf16.msra.mxu0 %v951
        %993 = vmatpush.bf16.msra.mxu0 %v950
        %994 = vmatpush.bf16.msra.mxu0 %v949
        %995 = vmatpush.bf16.msra.mxu0 %v948
        %996 = vmatpush.bf16.msra.mxu0 %v947
        %997 = vmatpush.bf16.msra.mxu0 %v946
        %998 = vmatpush.bf16.msra.mxu0 %v945
        %999 = vmatpush.bf16.msra.mxu0 %v944
        %1000 = vmatmul.bf16.gmra.mxu0 %v800
        %v1001 = vpop.f32.mrf.mxu0
        %v1002 = vadd.f32 %v718, %v1001
        %v1003 = vpop.f32.mrf.mxu0
        %v1004 = vadd.f32 %v718, %v1003
        %1005 = vmatmul.bf16.gmra.mxu0 %v803
        %v1006 = vpop.f32.mrf.mxu0
        %v1007 = vadd.f32 %v718, %v1006
        %v1008 = vpop.f32.mrf.mxu0
        %v1009 = vadd.f32 %v718, %v1008
        %1010 = vmatmul.bf16.gmra.mxu0 %v806
        %v1011 = vpop.f32.mrf.mxu0
        %v1012 = vadd.f32 %v718, %v1011
        %v1013 = vpop.f32.mrf.mxu0
        %v1014 = vadd.f32 %v718, %v1013
        %1015 = vmatmul.bf16.gmra.mxu0 %v809
        %v1016 = vpop.f32.mrf.mxu0
        %v1017 = vadd.f32 %v718, %v1016
        %v1018 = vpop.f32.mrf.mxu0
        %v1019 = vadd.f32 %v718, %v1018
        %1020 = vmatmul.bf16.gmra.mxu0 %v812
        %v1021 = vpop.f32.mrf.mxu0
        %v1022 = vadd.f32 %v718, %v1021
        %v1023 = vpop.f32.mrf.mxu0
        %v1024 = vadd.f32 %v718, %v1023
        %1025 = vmatmul.bf16.gmra.mxu0 %v815
        %v1026 = vpop.f32.mrf.mxu0
        %v1027 = vadd.f32 %v718, %v1026
        %v1028 = vpop.f32.mrf.mxu0
        %v1029 = vadd.f32 %v718, %v1028
        %1030 = vmatmul.bf16.gmra.mxu0 %v818
        %v1031 = vpop.f32.mrf.mxu0
        %v1032 = vadd.f32 %v718, %v1031
        %v1033 = vpop.f32.mrf.mxu0
        %v1034 = vadd.f32 %v718, %v1033
        %1035 = vmatmul.bf16.gmra.mxu0 %v821
        %v1036 = vpop.f32.mrf.mxu0
        %v1037 = vadd.f32 %v718, %v1036
        %v1038 = vpop.f32.mrf.mxu0
        %v1039 = vadd.f32 %v718, %v1038
        %1040 = vdwg.mxu0
        %1041 = vmatpush.bf16.msra.mxu0 %v959
        %1042 = vmatpush.bf16.msra.mxu0 %v958
        %1043 = vmatpush.bf16.msra.mxu0 %v957
        %1044 = vmatpush.bf16.msra.mxu0 %v956
        %1045 = vmatpush.bf16.msra.mxu0 %v955
        %1046 = vmatpush.bf16.msra.mxu0 %v954
        %1047 = vmatpush.bf16.msra.mxu0 %v953
        %1048 = vmatpush.bf16.msra.mxu0 %v952
        %1049 = vmatmul.bf16.gmra.mxu0 %v801
        %v1050 = vpop.f32.mrf.mxu0
        %v1051 = vadd.f32 %v1002, %v1050
        %v1052 = vpop.f32.mrf.mxu0
        %v1053 = vadd.f32 %v1004, %v1052
        %1054 = vmatmul.bf16.gmra.mxu0 %v804
        %v1055 = vpop.f32.mrf.mxu0
        %v1056 = vadd.f32 %v1007, %v1055
        %v1057 = vpop.f32.mrf.mxu0
        %v1058 = vadd.f32 %v1009, %v1057
        %1059 = vmatmul.bf16.gmra.mxu0 %v807
        %v1060 = vpop.f32.mrf.mxu0
        %v1061 = vadd.f32 %v1012, %v1060
        %v1062 = vpop.f32.mrf.mxu0
        %v1063 = vadd.f32 %v1014, %v1062
        %1064 = vmatmul.bf16.gmra.mxu0 %v810
        %v1065 = vpop.f32.mrf.mxu0
        %v1066 = vadd.f32 %v1017, %v1065
        %v1067 = vpop.f32.mrf.mxu0
        %v1068 = vadd.f32 %v1019, %v1067
        %1069 = vmatmul.bf16.gmra.mxu0 %v813
        %v1070 = vpop.f32.mrf.mxu0
        %v1071 = vadd.f32 %v1022, %v1070
        %v1072 = vpop.f32.mrf.mxu0
        %v1073 = vadd.f32 %v1024, %v1072
        %1074 = vmatmul.bf16.gmra.mxu0 %v816
        %v1075 = vpop.f32.mrf.mxu0
        %v1076 = vadd.f32 %v1027, %v1075
        %v1077 = vpop.f32.mrf.mxu0
        %v1078 = vadd.f32 %v1029, %v1077
        %1079 = vmatmul.bf16.gmra.mxu0 %v819
        %v1080 = vpop.f32.mrf.mxu0
        %v1081 = vadd.f32 %v1032, %v1080
        %v1082 = vpop.f32.mrf.mxu0
        %v1083 = vadd.f32 %v1034, %v1082
        %1084 = vmatmul.bf16.gmra.mxu0 %v822
        %v1085 = vpop.f32.mrf.mxu0
        %v1086 = vadd.f32 %v1037, %v1085
        %v1087 = vpop.f32.mrf.mxu0
        %v1088 = vadd.f32 %v1039, %v1087
        %1089 = vdwg.mxu0
        %1090 = vmatpush.bf16.msra.mxu0 %v967
        %1091 = vmatpush.bf16.msra.mxu0 %v966
        %1092 = vmatpush.bf16.msra.mxu0 %v965
        %1093 = vmatpush.bf16.msra.mxu0 %v964
        %1094 = vmatpush.bf16.msra.mxu0 %v963
        %1095 = vmatpush.bf16.msra.mxu0 %v962
        %1096 = vmatpush.bf16.msra.mxu0 %v961
        %1097 = vmatpush.bf16.msra.mxu0 %v960
        %1098 = vmatmul.bf16.gmra.mxu0 %v802
        %v1099 = vpop.f32.mrf.mxu0
        %v1100 = vadd.f32 %v1051, %v1099
        %v1101 = vpop.f32.mrf.mxu0
        %v1102 = vadd.f32 %v1053, %v1101
        %1103 = vmatmul.bf16.gmra.mxu0 %v805
        %v1104 = vpop.f32.mrf.mxu0
        %v1105 = vadd.f32 %v1056, %v1104
        %v1106 = vpop.f32.mrf.mxu0
        %v1107 = vadd.f32 %v1058, %v1106
        %1108 = vmatmul.bf16.gmra.mxu0 %v808
        %v1109 = vpop.f32.mrf.mxu0
        %v1110 = vadd.f32 %v1061, %v1109
        %v1111 = vpop.f32.mrf.mxu0
        %v1112 = vadd.f32 %v1063, %v1111
        %1113 = vmatmul.bf16.gmra.mxu0 %v811
        %v1114 = vpop.f32.mrf.mxu0
        %v1115 = vadd.f32 %v1066, %v1114
        %v1116 = vpop.f32.mrf.mxu0
        %v1117 = vadd.f32 %v1068, %v1116
        %1118 = vmatmul.bf16.gmra.mxu0 %v814
        %v1119 = vpop.f32.mrf.mxu0
        %v1120 = vadd.f32 %v1071, %v1119
        %v1121 = vpop.f32.mrf.mxu0
        %v1122 = vadd.f32 %v1073, %v1121
        %1123 = vmatmul.bf16.gmra.mxu0 %v817
        %v1124 = vpop.f32.mrf.mxu0
        %v1125 = vadd.f32 %v1076, %v1124
        %v1126 = vpop.f32.mrf.mxu0
        %v1127 = vadd.f32 %v1078, %v1126
        %1128 = vmatmul.bf16.gmra.mxu0 %v820
        %v1129 = vpop.f32.mrf.mxu0
        %v1130 = vadd.f32 %v1081, %v1129
        %v1131 = vpop.f32.mrf.mxu0
        %v1132 = vadd.f32 %v1083, %v1131
        %1133 = vmatmul.bf16.gmra.mxu0 %v823
        %v1134 = vpop.f32.mrf.mxu0
        %v1135 = vadd.f32 %v1086, %v1134
        %v1136 = vpop.f32.mrf.mxu0
        %v1137 = vadd.f32 %v1088, %v1136
        %1138 = vdwg.mxu0
        %s1139 = sld [smem:[#allocation4]]
        %vm1140 = vcmp.ge.f32.partialorder %v1100, 0.0
        %vm1141 = vcmp.ge.f32.partialorder %v1102, 0.0
        %vm1142 = vcmp.ge.f32.partialorder %v1105, 0.0
        %vm1143 = vcmp.ge.f32.partialorder %v1107, 0.0
        %vm1144 = vcmp.ge.f32.partialorder %v1110, 0.0
        %vm1145 = vcmp.ge.f32.partialorder %v1112, 0.0
        %vm1146 = vcmp.ge.f32.partialorder %v1115, 0.0
        %vm1147 = vcmp.ge.f32.partialorder %v1117, 0.0
        %vm1148 = vcmp.ge.f32.partialorder %v1120, 0.0
        %vm1149 = vcmp.ge.f32.partialorder %v1122, 0.0
        %vm1150 = vcmp.ge.f32.partialorder %v1125, 0.0
        %vm1151 = vcmp.ge.f32.partialorder %v1127, 0.0
        %vm1152 = vcmp.ge.f32.partialorder %v1130, 0.0
        %vm1153 = vcmp.ge.f32.partialorder %v1132, 0.0
        %vm1154 = vcmp.ge.f32.partialorder %v1135, 0.0
        %vm1155 = vcmp.ge.f32.partialorder %v1137, 0.0
        %v1156 = vstv %s1139
        %v1157 = vmul.f32 %v1156, %v1100
        %v1158 = vmul.f32 %v1156, %v1102
        %v1159 = vmul.f32 %v1156, %v1105
        %v1160 = vmul.f32 %v1156, %v1107
        %v1161 = vmul.f32 %v1156, %v1110
        %v1162 = vmul.f32 %v1156, %v1112
        %v1163 = vmul.f32 %v1156, %v1115
        %v1164 = vmul.f32 %v1156, %v1117
        %v1165 = vmul.f32 %v1156, %v1120
        %v1166 = vmul.f32 %v1156, %v1122
        %v1167 = vmul.f32 %v1156, %v1125
        %v1168 = vmul.f32 %v1156, %v1127
        %v1169 = vmul.f32 %v1156, %v1130
        %v1170 = vmul.f32 %v1156, %v1132
        %v1171 = vmul.f32 %v1156, %v1135
        %v1172 = vmul.f32 %v1156, %v1137
        %v1173 = vsel %vm1140, %v1100, %v1157
        %v1174 = vsel %vm1141, %v1102, %v1158
        %v1175 = vsel %vm1142, %v1105, %v1159
        %v1176 = vsel %vm1143, %v1107, %v1160
        %v1177 = vsel %vm1144, %v1110, %v1161
        %v1178 = vsel %vm1145, %v1112, %v1162
        %v1179 = vsel %vm1146, %v1115, %v1163
        %v1180 = vsel %vm1147, %v1117, %v1164
        %v1181 = vsel %vm1148, %v1120, %v1165
        %v1182 = vsel %vm1149, %v1122, %v1166
        %v1183 = vsel %vm1150, %v1125, %v1167
        %v1184 = vsel %vm1151, %v1127, %v1168
        %v1185 = vsel %vm1152, %v1130, %v1169
        %v1186 = vsel %vm1153, %v1132, %v1170
        %v1187 = vsel %vm1154, %v1135, %v1171
        %v1188 = vsel %vm1155, %v1137, %v1172
        %v1189 = vpack.c.bf16 %v1173, %v1173
        %v1190 = vpack.c.bf16 %v1174, %v1174
        %v1191 = vpack.c.bf16 %v1175, %v1175
        %v1192 = vpack.c.bf16 %v1176, %v1176
        %v1193 = vpack.c.bf16 %v1177, %v1177
        %v1194 = vpack.c.bf16 %v1178, %v1178
        %v1195 = vpack.c.bf16 %v1179, %v1179
        %v1196 = vpack.c.bf16 %v1180, %v1180
        %v1197 = vpack.c.bf16 %v1181, %v1181
        %v1198 = vpack.c.bf16 %v1182, %v1182
        %v1199 = vpack.c.bf16 %v1183, %v1183
        %v1200 = vpack.c.bf16 %v1184, %v1184
        %v1201 = vpack.c.bf16 %v1185, %v1185
        %v1202 = vpack.c.bf16 %v1186, %v1186
        %v1203 = vpack.c.bf16 %v1187, %v1187
        %v1204 = vpack.c.bf16 %v1188, %v1188
        %v1221 = vunpack.c.l.b16 %v1189
        %v1222 = vunpack.c.l.b16 %v1190
        %v1223 = vunpack.c.l.b16 %v1191
        %v1224 = vunpack.c.l.b16 %v1192
        %v1225 = vunpack.c.l.b16 %v1193
        %v1226 = vunpack.c.l.b16 %v1194
        %v1227 = vunpack.c.l.b16 %v1195
        %v1228 = vunpack.c.l.b16 %v1196
        %v1229 = vunpack.c.l.b16 %v1197
        %v1230 = vunpack.c.l.b16 %v1198
        %v1231 = vunpack.c.l.b16 %v1199
        %v1232 = vunpack.c.l.b16 %v1200
        %v1233 = vunpack.c.l.b16 %v1201
        %v1234 = vunpack.c.l.b16 %v1202
        %v1235 = vunpack.c.l.b16 %v1203
        %v1236 = vunpack.c.l.b16 %v1204
        %v1237 = vpack.c.b16 %v1222, %v1221
        %v1238 = vpack.c.b16 %v1224, %v1223
        %v1239 = vpack.c.b16 %v1226, %v1225
        %v1240 = vpack.c.b16 %v1228, %v1227
        %v1241 = vpack.c.b16 %v1230, %v1229
        %v1242 = vpack.c.b16 %v1232, %v1231
        %v1243 = vpack.c.b16 %v1234, %v1233
        %v1244 = vpack.c.b16 %v1236, %v1235
        %v1246 = vshrl.u32 %v1237, 16
        %v1248 = vrot.slane %v1246, 7
        %v1249 = vshll.u32 %v1237, 16
        %v1251 = vor.u32 %v1248, %v1249
        %v1253 = vshrl.u32 %v1238, 16
        %v1255 = vrot.slane %v1253, 7
        %v1256 = vshll.u32 %v1238, 16
        %v1258 = vor.u32 %v1255, %v1256
        %v1260 = vshrl.u32 %v1239, 16
        %v1262 = vrot.slane %v1260, 7
        %v1263 = vshll.u32 %v1239, 16
        %v1265 = vor.u32 %v1262, %v1263
        %v1267 = vshrl.u32 %v1240, 16
        %v1269 = vrot.slane %v1267, 7
        %v1270 = vshll.u32 %v1240, 16
        %v1272 = vor.u32 %v1269, %v1270
        %v1274 = vshrl.u32 %v1241, 16
        %v1276 = vrot.slane %v1274, 7
        %v1277 = vshll.u32 %v1241, 16
        %v1279 = vor.u32 %v1276, %v1277
        %v1281 = vshrl.u32 %v1242, 16
        %v1283 = vrot.slane %v1281, 7
        %v1284 = vshll.u32 %v1242, 16
        %v1286 = vor.u32 %v1283, %v1284
        %v1288 = vshrl.u32 %v1243, 16
        %v1290 = vrot.slane %v1288, 7
        %v1291 = vshll.u32 %v1243, 16
        %v1293 = vor.u32 %v1290, %v1291
        %v1295 = vshrl.u32 %v1244, 16
        %v1297 = vrot.slane %v1295, 7
        %v1298 = vshll.u32 %v1244, 16
        %v1300 = vor.u32 %v1297, %v1298
        %v1309 = vsel %vm432, 0, %v1251
        %v1310 = vsel %vm432, 0, %v1258
        %v1311 = vsel %vm432, 0, %v1265
        %v1312 = vsel %vm432, 0, %v1272
        %v1313 = vsel %vm432, 0, %v1279
        %v1314 = vsel %vm432, 0, %v1286
        %v1315 = vsel %vm432, 0, %v1293
        %v1316 = vsel %vm432, 0, %v1300
        %v1325 = vunpack.c.l.b16 %v1309
        %v1326 = vunpack.c.h.b16 %v1309
        %v1327 = vunpack.c.l.b16 %v1310
        %v1328 = vunpack.c.h.b16 %v1310
        %v1329 = vunpack.c.l.b16 %v1311
        %v1330 = vunpack.c.h.b16 %v1311
        %v1331 = vunpack.c.l.b16 %v1312
        %v1332 = vunpack.c.h.b16 %v1312
        %v1333 = vunpack.c.l.b16 %v1313
        %v1334 = vunpack.c.h.b16 %v1313
        %v1335 = vunpack.c.l.b16 %v1314
        %v1336 = vunpack.c.h.b16 %v1314
        %v1337 = vunpack.c.l.b16 %v1315
        %v1338 = vunpack.c.h.b16 %v1315
        %v1339 = vunpack.c.l.b16 %v1316
        %v1340 = vunpack.c.h.b16 %v1316
        %v1341 = vpack.c.b16 %v1325, %v1325
        %v1342 = vpack.c.b16 %v1326, %v1326
        %v1343 = vpack.c.b16 %v1327, %v1327
        %v1344 = vpack.c.b16 %v1328, %v1328
        %v1345 = vpack.c.b16 %v1329, %v1329
        %v1346 = vpack.c.b16 %v1330, %v1330
        %v1347 = vpack.c.b16 %v1331, %v1331
        %v1348 = vpack.c.b16 %v1332, %v1332
        %v1349 = vpack.c.b16 %v1333, %v1333
        %v1350 = vpack.c.b16 %v1334, %v1334
        %v1351 = vpack.c.b16 %v1335, %v1335
        %v1352 = vpack.c.b16 %v1336, %v1336
        %v1353 = vpack.c.b16 %v1337, %v1337
        %v1354 = vpack.c.b16 %v1338, %v1338
        %v1355 = vpack.c.b16 %v1339, %v1339
        %v1356 = vpack.c.b16 %v1340, %v1340
        %1373 = vst [vmem:[#allocation3] sm:$0xf] %v1341
        %1374 = vst [vmem:[#allocation3 + $0xc] sm:$0xf] %v1342
        %1375 = vst [vmem:[#allocation3 + $0x18] sm:$0xf] %v1343
        %1376 = vst [vmem:[#allocation3 + $0x24] sm:$0xf] %v1344
        %1377 = vst [vmem:[#allocation3 + $0x30] sm:$0xf] %v1345
        %1378 = vst [vmem:[#allocation3 + $0x3c] sm:$0xf] %v1346
        %1379 = vst [vmem:[#allocation3 + $0x48] sm:$0xf] %v1347
        %1380 = vst [vmem:[#allocation3 + $0x54] sm:$0xf] %v1348
        %1381 = vst [vmem:[#allocation3 + $0x60] sm:$0xf] %v1349
        %1382 = vst [vmem:[#allocation3 + $0x6c] sm:$0xf] %v1350
        %1383 = vst [vmem:[#allocation3 + $0x78] sm:$0xf] %v1351
        %1384 = vst [vmem:[#allocation3 + $0x84] sm:$0xf] %v1352
        %1385 = vst [vmem:[#allocation3 + $0x90] sm:$0xf] %v1353
        %1386 = vst [vmem:[#allocation3 + $0x9c] sm:$0xf] %v1354
        %1387 = vst [vmem:[#allocation3 + $0xa8] sm:$0xf] %v1355
        %1388 = vst [vmem:[#allocation3 + $0xb4] sm:$0xf] %v1356
        %1389 = vst [vmem:[#allocation3 + $0x4] sm:$0xf] %v1189
        %1390 = vst [vmem:[#allocation3 + $0x10] sm:$0xf] %v1190
        %1391 = vst [vmem:[#allocation3 + $0x1c] sm:$0xf] %v1191
        %1392 = vst [vmem:[#allocation3 + $0x28] sm:$0xf] %v1192
        %1393 = vst [vmem:[#allocation3 + $0x34] sm:$0xf] %v1193
        %1394 = vst [vmem:[#allocation3 + $0x40] sm:$0xf] %v1194
        %1395 = vst [vmem:[#allocation3 + $0x4c] sm:$0xf] %v1195
        %1396 = vst [vmem:[#allocation3 + $0x58] sm:$0xf] %v1196
        %1397 = vst [vmem:[#allocation3 + $0x64] sm:$0xf] %v1197
        %1398 = vst [vmem:[#allocation3 + $0x70] sm:$0xf] %v1198
        %1399 = vst [vmem:[#allocation3 + $0x7c] sm:$0xf] %v1199
        %1400 = vst [vmem:[#allocation3 + $0x88] sm:$0xf] %v1200
        %1401 = vst [vmem:[#allocation3 + $0x94] sm:$0xf] %v1201
        %1402 = vst [vmem:[#allocation3 + $0xa0] sm:$0xf] %v1202
        %1403 = vst [vmem:[#allocation3 + $0xac] sm:$0xf] %v1203
        %1404 = vst [vmem:[#allocation3 + $0xb8] sm:$0xf] %v1204
        %v1405 = vrot.slane %v1249, 1
        %v1406 = vor.u32 %v1246, %v1405
        %v1407 = vrot.slane %v1256, 1
        %v1408 = vor.u32 %v1253, %v1407
        %v1409 = vrot.slane %v1263, 1
        %v1410 = vor.u32 %v1260, %v1409
        %v1411 = vrot.slane %v1270, 1
        %v1412 = vor.u32 %v1267, %v1411
        %v1413 = vrot.slane %v1277, 1
        %v1414 = vor.u32 %v1274, %v1413
        %v1415 = vrot.slane %v1284, 1
        %v1416 = vor.u32 %v1281, %v1415
        %v1417 = vrot.slane %v1291, 1
        %v1418 = vor.u32 %v1288, %v1417
        %v1419 = vrot.slane %v1298, 1
        %v1420 = vor.u32 %v1295, %v1419
        %v1429 = vsel %vm555, %v1406, 0
        %v1430 = vsel %vm555, %v1408, 0
        %v1431 = vsel %vm555, %v1410, 0
        %v1432 = vsel %vm555, %v1412, 0
        %v1433 = vsel %vm555, %v1414, 0
        %v1434 = vsel %vm555, %v1416, 0
        %v1435 = vsel %vm555, %v1418, 0
        %v1436 = vsel %vm555, %v1420, 0
        %v1445 = vunpack.c.l.b16 %v1429
        %v1446 = vunpack.c.h.b16 %v1429
        %v1447 = vunpack.c.l.b16 %v1430
        %v1448 = vunpack.c.h.b16 %v1430
        %v1449 = vunpack.c.l.b16 %v1431
        %v1450 = vunpack.c.h.b16 %v1431
        %v1451 = vunpack.c.l.b16 %v1432
        %v1452 = vunpack.c.h.b16 %v1432
        %v1453 = vunpack.c.l.b16 %v1433
        %v1454 = vunpack.c.h.b16 %v1433
        %v1455 = vunpack.c.l.b16 %v1434
        %v1456 = vunpack.c.h.b16 %v1434
        %v1457 = vunpack.c.l.b16 %v1435
        %v1458 = vunpack.c.h.b16 %v1435
        %v1459 = vunpack.c.l.b16 %v1436
        %v1460 = vunpack.c.h.b16 %v1436
        %v1461 = vpack.c.b16 %v1445, %v1445
        %v1462 = vpack.c.b16 %v1446, %v1446
        %v1463 = vpack.c.b16 %v1447, %v1447
        %v1464 = vpack.c.b16 %v1448, %v1448
        %v1465 = vpack.c.b16 %v1449, %v1449
        %v1466 = vpack.c.b16 %v1450, %v1450
        %v1467 = vpack.c.b16 %v1451, %v1451
        %v1468 = vpack.c.b16 %v1452, %v1452
        %v1469 = vpack.c.b16 %v1453, %v1453
        %v1470 = vpack.c.b16 %v1454, %v1454
        %v1471 = vpack.c.b16 %v1455, %v1455
        %v1472 = vpack.c.b16 %v1456, %v1456
        %v1473 = vpack.c.b16 %v1457, %v1457
        %v1474 = vpack.c.b16 %v1458, %v1458
        %v1475 = vpack.c.b16 %v1459, %v1459
        %v1476 = vpack.c.b16 %v1460, %v1460
        %1493 = vst [vmem:[#allocation3 + $0x8] sm:$0xf] %v1461
        %1494 = vst [vmem:[#allocation3 + $0x14] sm:$0xf] %v1462
        %1495 = vst [vmem:[#allocation3 + $0x20] sm:$0xf] %v1463
        %1496 = vst [vmem:[#allocation3 + $0x2c] sm:$0xf] %v1464
        %1497 = vst [vmem:[#allocation3 + $0x38] sm:$0xf] %v1465
        %1498 = vst [vmem:[#allocation3 + $0x44] sm:$0xf] %v1466
        %1499 = vst [vmem:[#allocation3 + $0x50] sm:$0xf] %v1467
        %1500 = vst [vmem:[#allocation3 + $0x5c] sm:$0xf] %v1468
        %1501 = vst [vmem:[#allocation3 + $0x68] sm:$0xf] %v1469
        %1502 = vst [vmem:[#allocation3 + $0x74] sm:$0xf] %v1470
        %1503 = vst [vmem:[#allocation3 + $0x80] sm:$0xf] %v1471
        %1504 = vst [vmem:[#allocation3 + $0x8c] sm:$0xf] %v1472
        %1505 = vst [vmem:[#allocation3 + $0x98] sm:$0xf] %v1473
        %1506 = vst [vmem:[#allocation3 + $0xa4] sm:$0xf] %v1474
        %1507 = vst [vmem:[#allocation3 + $0xb0] sm:$0xf] %v1475
        %1508 = vst [vmem:[#allocation3 + $0xbc] sm:$0xf] %v1476
        %v1509 = vld [vmem:[#allocation3] sm:$0xff]
        %v1510 = vld [vmem:[#allocation3 + $0x8] sm:$0xf]
        %v1511 = vld [vmem:[#allocation3 + $0xc] sm:$0xff]
        %v1512 = vld [vmem:[#allocation3 + $0x14] sm:$0xf]
        %v1513 = vld [vmem:[#allocation3 + $0x18] sm:$0xff]
        %v1514 = vld [vmem:[#allocation3 + $0x20] sm:$0xf]
        %v1515 = vld [vmem:[#allocation3 + $0x24] sm:$0xff]
        %v1516 = vld [vmem:[#allocation3 + $0x2c] sm:$0xf]
        %v1517 = vld [vmem:[#allocation3 + $0x30] sm:$0xff]
        %v1518 = vld [vmem:[#allocation3 + $0x38] sm:$0xf]
        %v1519 = vld [vmem:[#allocation3 + $0x3c] sm:$0xff]
        %v1520 = vld [vmem:[#allocation3 + $0x44] sm:$0xf]
        %v1521 = vld [vmem:[#allocation3 + $0x48] sm:$0xff]
        %v1522 = vld [vmem:[#allocation3 + $0x50] sm:$0xf]
        %v1523 = vld [vmem:[#allocation3 + $0x54] sm:$0xff]
        %v1524 = vld [vmem:[#allocation3 + $0x5c] sm:$0xf]
        %v1525 = vld [vmem:[#allocation3 + $0x60] sm:$0xff]
        %v1526 = vld [vmem:[#allocation3 + $0x68] sm:$0xf]
        %v1527 = vld [vmem:[#allocation3 + $0x6c] sm:$0xff]
        %v1528 = vld [vmem:[#allocation3 + $0x74] sm:$0xf]
        %v1529 = vld [vmem:[#allocation3 + $0x78] sm:$0xff]
        %v1530 = vld [vmem:[#allocation3 + $0x80] sm:$0xf]
        %v1531 = vld [vmem:[#allocation3 + $0x84] sm:$0xff]
        %v1532 = vld [vmem:[#allocation3 + $0x8c] sm:$0xf]
        %v1533 = vld [vmem:[#allocation3 + $0x90] sm:$0xff]
        %v1534 = vld [vmem:[#allocation3 + $0x98] sm:$0xf]
        %v1535 = vld [vmem:[#allocation3 + $0x9c] sm:$0xff]
        %v1536 = vld [vmem:[#allocation3 + $0xa4] sm:$0xf]
        %v1537 = vld [vmem:[#allocation3 + $0xa8] sm:$0xff]
        %v1538 = vld [vmem:[#allocation3 + $0xb0] sm:$0xf]
        %v1539 = vld [vmem:[#allocation3 + $0xb4] sm:$0xff]
        %v1540 = vld [vmem:[#allocation3 + $0xbc] sm:$0xf]
        %v1541 = vld [vmem:[#allocation10] sm:$0xf]
        %v1542 = vld [vmem:[#allocation10 + $0x4] sm:$0xf]
        %v1543 = vld [vmem:[#allocation10 + $0x8] sm:$0xf]
        %v1544 = vld [vmem:[#allocation10 + $0xc] sm:$0xf]
        %v1545 = vld [vmem:[#allocation10 + $0x10] sm:$0xf]
        %v1546 = vld [vmem:[#allocation10 + $0x14] sm:$0xf]
        %v1547 = vld [vmem:[#allocation10 + $0x18] sm:$0xf]
        %v1548 = vld [vmem:[#allocation10 + $0x1c] sm:$0xf]
        %v1549 = vld [vmem:[#allocation10 + $0x20] sm:$0xf]
        %v1550 = vld [vmem:[#allocation10 + $0x24] sm:$0xf]
        %v1551 = vld [vmem:[#allocation10 + $0x28] sm:$0xf]
        %v1552 = vld [vmem:[#allocation10 + $0x2c] sm:$0xf]
        %v1553 = vld [vmem:[#allocation10 + $0x30] sm:$0xf]
        %v1554 = vld [vmem:[#allocation10 + $0x34] sm:$0xf]
        %v1555 = vld [vmem:[#allocation10 + $0x38] sm:$0xf]
        %v1556 = vld [vmem:[#allocation10 + $0x3c] sm:$0xf]
        %v1557 = vld [vmem:[#allocation10 + $0x40] sm:$0xf]
        %v1558 = vld [vmem:[#allocation10 + $0x44] sm:$0xf]
        %v1559 = vld [vmem:[#allocation10 + $0x48] sm:$0xf]
        %v1560 = vld [vmem:[#allocation10 + $0x4c] sm:$0xf]
        %v1561 = vld [vmem:[#allocation10 + $0x50] sm:$0xf]
        %v1562 = vld [vmem:[#allocation10 + $0x54] sm:$0xf]
        %v1563 = vld [vmem:[#allocation10 + $0x58] sm:$0xf]
        %v1564 = vld [vmem:[#allocation10 + $0x5c] sm:$0xf]
        %v1565 = vld [vmem:[#allocation10 + $0x60] sm:$0xf]
        %v1566 = vld [vmem:[#allocation10 + $0x64] sm:$0xf]
        %v1567 = vld [vmem:[#allocation10 + $0x68] sm:$0xf]
        %v1568 = vld [vmem:[#allocation10 + $0x6c] sm:$0xf]
        %v1569 = vld [vmem:[#allocation10 + $0x70] sm:$0xf]
        %v1570 = vld [vmem:[#allocation10 + $0x74] sm:$0xf]
        %v1571 = vld [vmem:[#allocation10 + $0x78] sm:$0xf]
        %v1572 = vld [vmem:[#allocation10 + $0x7c] sm:$0xf]
        %v1573 = vld [vmem:[#allocation10 + $0x80] sm:$0xf]
        %v1574 = vld [vmem:[#allocation10 + $0x84] sm:$0xf]
        %v1575 = vld [vmem:[#allocation10 + $0x88] sm:$0xf]
        %v1576 = vld [vmem:[#allocation10 + $0x8c] sm:$0xf]
        %v1577 = vld [vmem:[#allocation10 + $0x90] sm:$0xf]
        %v1578 = vld [vmem:[#allocation10 + $0x94] sm:$0xf]
        %v1579 = vld [vmem:[#allocation10 + $0x98] sm:$0xf]
        %v1580 = vld [vmem:[#allocation10 + $0x9c] sm:$0xf]
        %v1581 = vld [vmem:[#allocation10 + $0xa0] sm:$0xf]
        %v1582 = vld [vmem:[#allocation10 + $0xa4] sm:$0xf]
        %v1583 = vld [vmem:[#allocation10 + $0xa8] sm:$0xf]
        %v1584 = vld [vmem:[#allocation10 + $0xac] sm:$0xf]
        %v1585 = vld [vmem:[#allocation10 + $0xb0] sm:$0xf]
        %v1586 = vld [vmem:[#allocation10 + $0xb4] sm:$0xf]
        %v1587 = vld [vmem:[#allocation10 + $0xb8] sm:$0xf]
        %v1588 = vld [vmem:[#allocation10 + $0xbc] sm:$0xf]
        %v1589 = vld [vmem:[%s4] sm:$0x1]
        %v1591 = vperm.slane %v1589, 0
        %v1625 = vunpack.c.l.b16 %v1509
        %v1626 = vunpack.c.h.b16 %v1509
        %v1627 = vunpack.c.l.b16 %v1510
        %v1628 = vunpack.c.l.b16 %v1511
        %v1629 = vunpack.c.h.b16 %v1511
        %v1630 = vunpack.c.l.b16 %v1512
        %v1631 = vunpack.c.l.b16 %v1513
        %v1632 = vunpack.c.h.b16 %v1513
        %v1633 = vunpack.c.l.b16 %v1514
        %v1634 = vunpack.c.l.b16 %v1515
        %v1635 = vunpack.c.h.b16 %v1515
        %v1636 = vunpack.c.l.b16 %v1516
        %v1637 = vunpack.c.l.b16 %v1517
        %v1638 = vunpack.c.h.b16 %v1517
        %v1639 = vunpack.c.l.b16 %v1518
        %v1640 = vunpack.c.l.b16 %v1519
        %v1641 = vunpack.c.h.b16 %v1519
        %v1642 = vunpack.c.l.b16 %v1520
        %v1643 = vunpack.c.l.b16 %v1521
        %v1644 = vunpack.c.h.b16 %v1521
        %v1645 = vunpack.c.l.b16 %v1522
        %v1646 = vunpack.c.l.b16 %v1523
        %v1647 = vunpack.c.h.b16 %v1523
        %v1648 = vunpack.c.l.b16 %v1524
        %v1649 = vunpack.c.l.b16 %v1525
        %v1650 = vunpack.c.h.b16 %v1525
        %v1651 = vunpack.c.l.b16 %v1526
        %v1652 = vunpack.c.l.b16 %v1527
        %v1653 = vunpack.c.h.b16 %v1527
        %v1654 = vunpack.c.l.b16 %v1528
        %v1655 = vunpack.c.l.b16 %v1529
        %v1656 = vunpack.c.h.b16 %v1529
        %v1657 = vunpack.c.l.b16 %v1530
        %v1658 = vunpack.c.l.b16 %v1531
        %v1659 = vunpack.c.h.b16 %v1531
        %v1660 = vunpack.c.l.b16 %v1532
        %v1661 = vunpack.c.l.b16 %v1533
        %v1662 = vunpack.c.h.b16 %v1533
        %v1663 = vunpack.c.l.b16 %v1534
        %v1664 = vunpack.c.l.b16 %v1535
        %v1665 = vunpack.c.h.b16 %v1535
        %v1666 = vunpack.c.l.b16 %v1536
        %v1667 = vunpack.c.l.b16 %v1537
        %v1668 = vunpack.c.h.b16 %v1537
        %v1669 = vunpack.c.l.b16 %v1538
        %v1670 = vunpack.c.l.b16 %v1539
        %v1671 = vunpack.c.h.b16 %v1539
        %v1672 = vunpack.c.l.b16 %v1540
        %v1673 = vpack.c.b16 %v1628, %v1625
        %v1674 = vpack.c.b16 %v1629, %v1626
        %v1675 = vpack.c.b16 %v1630, %v1627
        %v1676 = vpack.c.b16 %v1634, %v1631
        %v1677 = vpack.c.b16 %v1635, %v1632
        %v1678 = vpack.c.b16 %v1636, %v1633
        %v1679 = vpack.c.b16 %v1640, %v1637
        %v1680 = vpack.c.b16 %v1641, %v1638
        %v1681 = vpack.c.b16 %v1642, %v1639
        %v1682 = vpack.c.b16 %v1646, %v1643
        %v1683 = vpack.c.b16 %v1647, %v1644
        %v1684 = vpack.c.b16 %v1648, %v1645
        %v1685 = vpack.c.b16 %v1652, %v1649
        %v1686 = vpack.c.b16 %v1653, %v1650
        %v1687 = vpack.c.b16 %v1654, %v1651
        %v1688 = vpack.c.b16 %v1658, %v1655
        %v1689 = vpack.c.b16 %v1659, %v1656
        %v1690 = vpack.c.b16 %v1660, %v1657
        %v1691 = vpack.c.b16 %v1664, %v1661
        %v1692 = vpack.c.b16 %v1665, %v1662
        %v1693 = vpack.c.b16 %v1666, %v1663
        %v1694 = vpack.c.b16 %v1670, %v1667
        %v1695 = vpack.c.b16 %v1671, %v1668
        %v1696 = vpack.c.b16 %v1672, %v1669
        %v1769 = vunpack.c.l.b16 %v1541
        %v1770 = vunpack.c.l.b16 %v1542
        %v1771 = vunpack.c.l.b16 %v1543
        %v1772 = vunpack.c.l.b16 %v1544
        %v1773 = vunpack.c.l.b16 %v1545
        %v1774 = vunpack.c.l.b16 %v1546
        %v1775 = vunpack.c.l.b16 %v1547
        %v1776 = vunpack.c.l.b16 %v1548
        %v1777 = vunpack.c.l.b16 %v1549
        %v1778 = vunpack.c.l.b16 %v1550
        %v1779 = vunpack.c.l.b16 %v1551
        %v1780 = vunpack.c.l.b16 %v1552
        %v1781 = vunpack.c.l.b16 %v1553
        %v1782 = vunpack.c.l.b16 %v1554
        %v1783 = vunpack.c.l.b16 %v1555
        %v1784 = vunpack.c.l.b16 %v1556
        %v1785 = vunpack.c.l.b16 %v1557
        %v1786 = vunpack.c.l.b16 %v1558
        %v1787 = vunpack.c.l.b16 %v1559
        %v1788 = vunpack.c.l.b16 %v1560
        %v1789 = vunpack.c.l.b16 %v1561
        %v1790 = vunpack.c.l.b16 %v1562
        %v1791 = vunpack.c.l.b16 %v1563
        %v1792 = vunpack.c.l.b16 %v1564
        %v1793 = vunpack.c.l.b16 %v1565
        %v1794 = vunpack.c.l.b16 %v1566
        %v1795 = vunpack.c.l.b16 %v1567
        %v1796 = vunpack.c.l.b16 %v1568
        %v1797 = vunpack.c.l.b16 %v1569
        %v1798 = vunpack.c.l.b16 %v1570
        %v1799 = vunpack.c.l.b16 %v1571
        %v1800 = vunpack.c.l.b16 %v1572
        %v1801 = vunpack.c.l.b16 %v1573
        %v1802 = vunpack.c.l.b16 %v1574
        %v1803 = vunpack.c.l.b16 %v1575
        %v1804 = vunpack.c.l.b16 %v1576
        %v1805 = vunpack.c.l.b16 %v1577
        %v1806 = vunpack.c.l.b16 %v1578
        %v1807 = vunpack.c.l.b16 %v1579
        %v1808 = vunpack.c.l.b16 %v1580
        %v1809 = vunpack.c.l.b16 %v1581
        %v1810 = vunpack.c.l.b16 %v1582
        %v1811 = vunpack.c.l.b16 %v1583
        %v1812 = vunpack.c.l.b16 %v1584
        %v1813 = vunpack.c.l.b16 %v1585
        %v1814 = vunpack.c.l.b16 %v1586
        %v1815 = vunpack.c.l.b16 %v1587
        %v1816 = vunpack.c.l.b16 %v1588
        %v1817 = vpack.c.b16 %v1770, %v1769
        %v1818 = vpack.c.b16 %v1772, %v1771
        %v1819 = vpack.c.b16 %v1774, %v1773
        %v1820 = vpack.c.b16 %v1776, %v1775
        %v1821 = vpack.c.b16 %v1778, %v1777
        %v1822 = vpack.c.b16 %v1780, %v1779
        %v1823 = vpack.c.b16 %v1782, %v1781
        %v1824 = vpack.c.b16 %v1784, %v1783
        %v1825 = vpack.c.b16 %v1786, %v1785
        %v1826 = vpack.c.b16 %v1788, %v1787
        %v1827 = vpack.c.b16 %v1790, %v1789
        %v1828 = vpack.c.b16 %v1792, %v1791
        %v1829 = vpack.c.b16 %v1794, %v1793
        %v1830 = vpack.c.b16 %v1796, %v1795
        %v1831 = vpack.c.b16 %v1798, %v1797
        %v1832 = vpack.c.b16 %v1800, %v1799
        %v1833 = vpack.c.b16 %v1802, %v1801
        %v1834 = vpack.c.b16 %v1804, %v1803
        %v1835 = vpack.c.b16 %v1806, %v1805
        %v1836 = vpack.c.b16 %v1808, %v1807
        %v1837 = vpack.c.b16 %v1810, %v1809
        %v1838 = vpack.c.b16 %v1812, %v1811
        %v1839 = vpack.c.b16 %v1814, %v1813
        %v1840 = vpack.c.b16 %v1816, %v1815
        %1865 = vmatpush.bf16.msra.mxu0 %v1824
        %1866 = vmatpush.bf16.msra.mxu0 %v1823
        %1867 = vmatpush.bf16.msra.mxu0 %v1822
        %1868 = vmatpush.bf16.msra.mxu0 %v1821
        %1869 = vmatpush.bf16.msra.mxu0 %v1820
        %1870 = vmatpush.bf16.msra.mxu0 %v1819
        %1871 = vmatpush.bf16.msra.mxu0 %v1818
        %1872 = vmatpush.bf16.msra.mxu0 %v1817
        %1873 = vmatmul.bf16.gmra.mxu0 %v1673
        %v1874 = vpop.f32.mrf.mxu0
        %v1875 = vadd.f32 %v1591, %v1874
        %v1876 = vpop.f32.mrf.mxu0
        %v1877 = vadd.f32 %v1591, %v1876
        %1878 = vmatmul.bf16.gmra.mxu0 %v1676
        %v1879 = vpop.f32.mrf.mxu0
        %v1880 = vadd.f32 %v1591, %v1879
        %v1881 = vpop.f32.mrf.mxu0
        %v1882 = vadd.f32 %v1591, %v1881
        %1883 = vmatmul.bf16.gmra.mxu0 %v1679
        %v1884 = vpop.f32.mrf.mxu0
        %v1885 = vadd.f32 %v1591, %v1884
        %v1886 = vpop.f32.mrf.mxu0
        %v1887 = vadd.f32 %v1591, %v1886
        %1888 = vmatmul.bf16.gmra.mxu0 %v1682
        %v1889 = vpop.f32.mrf.mxu0
        %v1890 = vadd.f32 %v1591, %v1889
        %v1891 = vpop.f32.mrf.mxu0
        %v1892 = vadd.f32 %v1591, %v1891
        %1893 = vmatmul.bf16.gmra.mxu0 %v1685
        %v1894 = vpop.f32.mrf.mxu0
        %v1895 = vadd.f32 %v1591, %v1894
        %v1896 = vpop.f32.mrf.mxu0
        %v1897 = vadd.f32 %v1591, %v1896
        %1898 = vmatmul.bf16.gmra.mxu0 %v1688
        %v1899 = vpop.f32.mrf.mxu0
        %v1900 = vadd.f32 %v1591, %v1899
        %v1901 = vpop.f32.mrf.mxu0
        %v1902 = vadd.f32 %v1591, %v1901
        %1903 = vmatmul.bf16.gmra.mxu0 %v1691
        %v1904 = vpop.f32.mrf.mxu0
        %v1905 = vadd.f32 %v1591, %v1904
        %v1906 = vpop.f32.mrf.mxu0
        %v1907 = vadd.f32 %v1591, %v1906
        %1908 = vmatmul.bf16.gmra.mxu0 %v1694
        %v1909 = vpop.f32.mrf.mxu0
        %v1910 = vadd.f32 %v1591, %v1909
        %v1911 = vpop.f32.mrf.mxu0
        %v1912 = vadd.f32 %v1591, %v1911
        %1913 = vdwg.mxu0
        %1914 = vmatpush.bf16.msra.mxu0 %v1832
        %1915 = vmatpush.bf16.msra.mxu0 %v1831
        %1916 = vmatpush.bf16.msra.mxu0 %v1830
        %1917 = vmatpush.bf16.msra.mxu0 %v1829
        %1918 = vmatpush.bf16.msra.mxu0 %v1828
        %1919 = vmatpush.bf16.msra.mxu0 %v1827
        %1920 = vmatpush.bf16.msra.mxu0 %v1826
        %1921 = vmatpush.bf16.msra.mxu0 %v1825
        %1922 = vmatmul.bf16.gmra.mxu0 %v1674
        %v1923 = vpop.f32.mrf.mxu0
        %v1924 = vadd.f32 %v1875, %v1923
        %v1925 = vpop.f32.mrf.mxu0
        %v1926 = vadd.f32 %v1877, %v1925
        %1927 = vmatmul.bf16.gmra.mxu0 %v1677
        %v1928 = vpop.f32.mrf.mxu0
        %v1929 = vadd.f32 %v1880, %v1928
        %v1930 = vpop.f32.mrf.mxu0
        %v1931 = vadd.f32 %v1882, %v1930
        %1932 = vmatmul.bf16.gmra.mxu0 %v1680
        %v1933 = vpop.f32.mrf.mxu0
        %v1934 = vadd.f32 %v1885, %v1933
        %v1935 = vpop.f32.mrf.mxu0
        %v1936 = vadd.f32 %v1887, %v1935
        %1937 = vmatmul.bf16.gmra.mxu0 %v1683
        %v1938 = vpop.f32.mrf.mxu0
        %v1939 = vadd.f32 %v1890, %v1938
        %v1940 = vpop.f32.mrf.mxu0
        %v1941 = vadd.f32 %v1892, %v1940
        %1942 = vmatmul.bf16.gmra.mxu0 %v1686
        %v1943 = vpop.f32.mrf.mxu0
        %v1944 = vadd.f32 %v1895, %v1943
        %v1945 = vpop.f32.mrf.mxu0
        %v1946 = vadd.f32 %v1897, %v1945
        %1947 = vmatmul.bf16.gmra.mxu0 %v1689
        %v1948 = vpop.f32.mrf.mxu0
        %v1949 = vadd.f32 %v1900, %v1948
        %v1950 = vpop.f32.mrf.mxu0
        %v1951 = vadd.f32 %v1902, %v1950
        %1952 = vmatmul.bf16.gmra.mxu0 %v1692
        %v1953 = vpop.f32.mrf.mxu0
        %v1954 = vadd.f32 %v1905, %v1953
        %v1955 = vpop.f32.mrf.mxu0
        %v1956 = vadd.f32 %v1907, %v1955
        %1957 = vmatmul.bf16.gmra.mxu0 %v1695
        %v1958 = vpop.f32.mrf.mxu0
        %v1959 = vadd.f32 %v1910, %v1958
        %v1960 = vpop.f32.mrf.mxu0
        %v1961 = vadd.f32 %v1912, %v1960
        %1962 = vdwg.mxu0
        %1963 = vmatpush.bf16.msra.mxu0 %v1840
        %1964 = vmatpush.bf16.msra.mxu0 %v1839
        %1965 = vmatpush.bf16.msra.mxu0 %v1838
        %1966 = vmatpush.bf16.msra.mxu0 %v1837
        %1967 = vmatpush.bf16.msra.mxu0 %v1836
        %1968 = vmatpush.bf16.msra.mxu0 %v1835
        %1969 = vmatpush.bf16.msra.mxu0 %v1834
        %1970 = vmatpush.bf16.msra.mxu0 %v1833
        %1971 = vmatmul.bf16.gmra.mxu0 %v1675
        %v1972 = vpop.f32.mrf.mxu0
        %v1973 = vadd.f32 %v1924, %v1972
        %v1974 = vpop.f32.mrf.mxu0
        %v1975 = vadd.f32 %v1926, %v1974
        %1976 = vmatmul.bf16.gmra.mxu0 %v1678
        %v1977 = vpop.f32.mrf.mxu0
        %v1978 = vadd.f32 %v1929, %v1977
        %v1979 = vpop.f32.mrf.mxu0
        %v1980 = vadd.f32 %v1931, %v1979
        %1981 = vmatmul.bf16.gmra.mxu0 %v1681
        %v1982 = vpop.f32.mrf.mxu0
        %v1983 = vadd.f32 %v1934, %v1982
        %v1984 = vpop.f32.mrf.mxu0
        %v1985 = vadd.f32 %v1936, %v1984
        %1986 = vmatmul.bf16.gmra.mxu0 %v1684
        %v1987 = vpop.f32.mrf.mxu0
        %v1988 = vadd.f32 %v1939, %v1987
        %v1989 = vpop.f32.mrf.mxu0
        %v1990 = vadd.f32 %v1941, %v1989
        %1991 = vmatmul.bf16.gmra.mxu0 %v1687
        %v1992 = vpop.f32.mrf.mxu0
        %v1993 = vadd.f32 %v1944, %v1992
        %v1994 = vpop.f32.mrf.mxu0
        %v1995 = vadd.f32 %v1946, %v1994
        %1996 = vmatmul.bf16.gmra.mxu0 %v1690
        %v1997 = vpop.f32.mrf.mxu0
        %v1998 = vadd.f32 %v1949, %v1997
        %v1999 = vpop.f32.mrf.mxu0
        %v2000 = vadd.f32 %v1951, %v1999
        %2001 = vmatmul.bf16.gmra.mxu0 %v1693
        %v2002 = vpop.f32.mrf.mxu0
        %v2003 = vadd.f32 %v1954, %v2002
        %v2004 = vpop.f32.mrf.mxu0
        %v2005 = vadd.f32 %v1956, %v2004
        %2006 = vmatmul.bf16.gmra.mxu0 %v1696
        %v2007 = vpop.f32.mrf.mxu0
        %v2008 = vadd.f32 %v1959, %v2007
        %v2009 = vpop.f32.mrf.mxu0
        %v2010 = vadd.f32 %v1961, %v2009
        %2011 = vdwg.mxu0
        %v2012 = vld [vmem:[%s267] sm:$0xf]
        %v2013 = vld [vmem:[%s267 + $0x4] sm:$0xf]
        %v2014 = vld [vmem:[%s267 + $0x8] sm:$0xf]
        %v2015 = vld [vmem:[%s267 + $0xc] sm:$0xf]
        %v2016 = vld [vmem:[%s267 + $0x10] sm:$0xf]
        %v2017 = vld [vmem:[%s267 + $0x14] sm:$0xf]
        %v2018 = vld [vmem:[%s267 + $0x18] sm:$0xf]
        %v2019 = vld [vmem:[%s267 + $0x1c] sm:$0xf]
        %v2020 = vld [vmem:[%s267 + $0x20] sm:$0xf]
        %v2021 = vld [vmem:[%s267 + $0x24] sm:$0xf]
        %v2022 = vld [vmem:[%s267 + $0x28] sm:$0xf]
        %v2023 = vld [vmem:[%s267 + $0x2c] sm:$0xf]
        %v2024 = vld [vmem:[%s267 + $0x30] sm:$0xf]
        %v2025 = vld [vmem:[%s267 + $0x34] sm:$0xf]
        %v2026 = vld [vmem:[%s267 + $0x38] sm:$0xf]
        %v2027 = vld [vmem:[%s267 + $0x3c] sm:$0xf]
        %v2028 = vunpack.c.l.bf16 %v2012
        %v2029 = vunpack.c.l.bf16 %v2013
        %v2030 = vunpack.c.l.bf16 %v2014
        %v2031 = vunpack.c.l.bf16 %v2015
        %v2032 = vunpack.c.l.bf16 %v2016
        %v2033 = vunpack.c.l.bf16 %v2017
        %v2034 = vunpack.c.l.bf16 %v2018
        %v2035 = vunpack.c.l.bf16 %v2019
        %v2036 = vunpack.c.l.bf16 %v2020
        %v2037 = vunpack.c.l.bf16 %v2021
        %v2038 = vunpack.c.l.bf16 %v2022
        %v2039 = vunpack.c.l.bf16 %v2023
        %v2040 = vunpack.c.l.bf16 %v2024
        %v2041 = vunpack.c.l.bf16 %v2025
        %v2042 = vunpack.c.l.bf16 %v2026
        %v2043 = vunpack.c.l.bf16 %v2027
        %v2044 = vadd.f32 %v1973, %v2028
        %v2045 = vadd.f32 %v1975, %v2029
        %v2046 = vadd.f32 %v1978, %v2030
        %v2047 = vadd.f32 %v1980, %v2031
        %v2048 = vadd.f32 %v1983, %v2032
        %v2049 = vadd.f32 %v1985, %v2033
        %v2050 = vadd.f32 %v1988, %v2034
        %v2051 = vadd.f32 %v1990, %v2035
        %v2052 = vadd.f32 %v1993, %v2036
        %v2053 = vadd.f32 %v1995, %v2037
        %v2054 = vadd.f32 %v1998, %v2038
        %v2055 = vadd.f32 %v2000, %v2039
        %v2056 = vadd.f32 %v2003, %v2040
        %v2057 = vadd.f32 %v2005, %v2041
        %v2058 = vadd.f32 %v2008, %v2042
        %v2059 = vadd.f32 %v2010, %v2043
        %2060 = vst [vmem:[%s306] sm:$0xff] %v2044
        %2061 = vst [vmem:[%s306 + $0x8] sm:$0xff] %v2045
        %2062 = vst [vmem:[%s306 + $0x10] sm:$0xff] %v2046
        %2063 = vst [vmem:[%s306 + $0x18] sm:$0xff] %v2047
        %2064 = vst [vmem:[%s306 + $0x20] sm:$0xff] %v2048
        %2065 = vst [vmem:[%s306 + $0x28] sm:$0xff] %v2049
        %2066 = vst [vmem:[%s306 + $0x30] sm:$0xff] %v2050
        %2067 = vst [vmem:[%s306 + $0x38] sm:$0xff] %v2051
        %2068 = vst [vmem:[%s306 + $0x40] sm:$0xff] %v2052
        %2069 = vst [vmem:[%s306 + $0x48] sm:$0xff] %v2053
        %2070 = vst [vmem:[%s306 + $0x50] sm:$0xff] %v2054
        %2071 = vst [vmem:[%s306 + $0x58] sm:$0xff] %v2055
        %2072 = vst [vmem:[%s306 + $0x60] sm:$0xff] %v2056
        %2073 = vst [vmem:[%s306 + $0x68] sm:$0xff] %v2057
        %2074 = vst [vmem:[%s306 + $0x70] sm:$0xff] %v2058
        %2075 = vst [vmem:[%s306 + $0x78] sm:$0xff] %v2059
        %s2076 = sand.u32 %s164, 1
        %s2077 = scalar_lea.sflag [#allocation7], %s2076
        %s2078 = sand.u32 %s164, 1
        %s2079 = smul.addr %s2078, 128
        %s2080 = scalar_lea.vmem [#allocation11], %s2079
        // Predicated region
        $region57: #{tpu_custom_call.1} parent=43 // pred_check
          %p2081 = pneg %p174
        $region58: #{tpu_custom_call.1} parent=43 // pred_check_branch
          %2083 = sbr.rel (%p2081) target = $region60
        $region59: #{tpu_custom_call.1} parent=43 // pred_region
          %s2084 = smul.u32 8, %s25
          %2086 = vsyncadd %s2077, 0
          %s2087 = smul.addr %s2084, 2
          %s2088 = smul.addr %s2087, 8
          %s2089 = scalar_lea.hbm %s6, %s2088
          %s2090 = sshll.u32 %s2080, 4
          %s2091 = int_to_ptr.vmem [resolvable:$true] %s2090
          %s2092 = sshll.u32 %s2089, 4
          %s2093 = int_to_ptr.hbm [resolvable:$true] %s2092
          %2098 = dma.vmem_to_hbm [thread:$0]  %s2091, 2048, %s2093, %s2077, 128, 128, 8
        $region60: #{tpu_custom_call.1} parent=43 // pred_fallthru
          _
      $region44: #{tpu_custom_call.1} parent=5 // pred_fallthru
        _
      %p2099 = scmp.le.s32.totalorder 2, %s20
      // Predicated region
      $region61: #{tpu_custom_call.1} parent=5 // pred_check
        %p2100 = pneg %p2099
      $region62: #{tpu_custom_call.1} parent=5 // pred_check_branch
        %2102 = sbr.rel (%p2100) target = $region64
      $region63: #{tpu_custom_call.1} parent=5 // pred_region
        %s2103 = ssub.s32 %s20, 2
        // Predicated region
        $region65: #{tpu_custom_call.1} parent=63 // pred_check
          %p2104 = pneg %p180
        $region66: #{tpu_custom_call.1} parent=63 // pred_check_branch
          %2106 = sbr.rel (%p2104) target = $region68
        $region67: #{tpu_custom_call.1} parent=63 // pred_region
          %s2107 = sand.u32 %s165, 1
          %s2108 = scalar_lea.sflag [#allocation7], %s2107
          %s2109 = sand.u32 %s165, 1
          %s2110 = smul.addr %s2109, 128
          %s2111 = scalar_lea.vmem [#allocation11], %s2110
          %2113 = dma.done %s2108, 2048
        $region68: #{tpu_custom_call.1} parent=63 // pred_fallthru
          _
      $region64: #{tpu_custom_call.1} parent=5 // pred_fallthru
        _
    $region6: #{tpu_custom_call.1} parent=1 // loop_footer
      %s24 = sadd.s32 1, %s20
    $region7: #{tpu_custom_call.1} parent=1 // loop_footer_branch
      %19 = sbr.rel target = $region3
    $region8: #{tpu_custom_call.1} parent=1 // loop_exit
      _
    %2114 = vsyncpa [#allocation6], 1
    %s2115 = scalar_lea.sflag [#allocation6], 1
    %2116 = vsyncpa %s2115, 1
    %2117 = vsyncpa [#allocation9], 1
    %2118 = vsyncpa [#allocation7], 1
    %s2119 = scalar_lea.sflag [#allocation7], 1
    %2120 = vsyncpa %s2119, 1

</llo_original>
